<compile_context>
chip_gen: v5e
topology: v5e:2x2
jax: 0.10.0
libtpu: 0.0.40
codegen_flags: <defaults>
</compile_context>

<pallas_src>
import numpy as np
import jax
import jax.numpy as jnp
from jax.experimental import pallas as pl
from jax.experimental.pallas import tpu as pltpu


# -----------------------------------------------------------------------------
# Pallas kernel: full GNNpred forward for one graph batch.
# -----------------------------------------------------------------------------
def gnnpred_kernel(
    # graph structure (precomputed dense linear operators; no edge dim)
    node_oh,      # [Np, 11]     one-hot node attributes (zero rows for padding)
    a_stack,      # [2Np, Np]    rows 0:Np = A_in (u->v counts), Np:2Np = A_out
    deg,          # [Np, 2]      col0 = in-degree, col1 = out-degree
    pmat,         # [B, Np]      graph-assignment one-hot (scatter-add pooling)
    pmat_t,       # [Np, B]      transpose of pmat (per-node broadcast)
    hyp,          # [B, 5]       per-graph hyperparameters
    # NodeEmb
    emb_tab,      # [11, n]
    # HypEmb
    w_fc1, b_fc1,             # [5,5], [1,5]
    # GNN layers, message weights folded into GRU input projection (wrapper)
    w_big,                    # [L, 5n, 6n]  [[W_gi, 0],[0, W_hh(r|z|n)]]
    bias_gi,                  # [L, Np, 3n]  indeg*b_msg@Wih + outdeg*b_msgr@Wih + b_ih
    b_hh_pack,                # [L, 1, 3n]
    # GraphEmb (gsum), f_m and g_m fused
    w_ge, b_ge,               # [n+5, sdim+1], [1, sdim+1]
    # GetAcc head (2 regression layers, dropout p=0)
    w_h0, b_h0,               # [sdim, sdim//2], [1, sdim//2]
    w_h1, b_h1,               # [sdim//2, dim_target], [1, dim_target]
    # output
    out_ref,                  # [B, dim_target]
):
    f32 = jnp.float32
    n = emb_tab.shape[1]
    L = w_big.shape[0]
    Np = deg.shape[0]
    sdim = w_h0.shape[0]

    def mm(a, b):
        return jnp.dot(a, b, preferred_element_type=f32)

    # --- NodeEmb: embedding lookup as one-hot matmul -------------------------
    h = mm(node_oh[...], emb_tab[...])                      # [Np, n]

    A = a_stack[...]                                        # [2Np, Np]
    indeg = deg[:, 0:1]                                     # [Np, 1]
    outdeg = deg[:, 1:2]                                    # [Np, 1]

    # --- GNN propagation layers (dropout is identity in eval mode) -----------
    # Per layer: 2 MXU ops total (was 4 in v2, ~14 in v1).
    for l in range(L):
        AH = mm(A, h)                                       # [2Np, n]
        H5 = jnp.concatenate(
            [AH[:Np], AH[Np:], indeg * h, outdeg * h, h], axis=1)   # [Np, 5n]
        G = mm(H5, w_big[l])                                # [Np, 6n]

        gi = G[:, 0:3 * n] + bias_gi[l]                     # packed input gates
        gh = G[:, 3 * n:6 * n] + b_hh_pack[l]               # packed hidden gates

        r = jax.nn.sigmoid(gi[:, 0:n] + gh[:, 0:n])
        z = jax.nn.sigmoid(gi[:, n:2 * n] + gh[:, n:2 * n])
        nt = jnp.tanh(gi[:, 2 * n:3 * n] + r * gh[:, 2 * n:3 * n])
        h = (1.0 - z) * nt + z * h                          # [Np, n]

    # --- HypEmb + per-node broadcast ("repeat(30, 1)") via batch one-hot -----
    hyp_e = jnp.maximum(mm(hyp[...], w_fc1[...]) + b_fc1[...], 0.0)    # [B, 5]
    hyp_rep = mm(pmat_t[...], hyp_e)                                    # [Np, 5]

    # --- GraphEmb (gsum): f_m and g_m fused into one matmul ------------------
    hcat = jnp.concatenate([h, hyp_rep], axis=1)                        # [Np, n+5]
    fg = mm(hcat, w_ge[...]) + b_ge[...]                                # [Np, sdim+1]
    h_vG = fg[:, :sdim]
    g_vG = jax.nn.sigmoid(fg[:, sdim:sdim + 1])
    pooled = mm(pmat[...], h_vG * g_vG)                                 # [B, sdim]

    # --- GetAcc head (dropout p=0): relu(Linear) -> Linear --------------------
    r0 = jnp.maximum(mm(pooled, w_h0[...]) + b_h0[...], 0.0)
    out_ref[...] = mm(r0, w_h1[...]) + b_h1[...]


# -----------------------------------------------------------------------------
# Wrapper: precomputes adjacency operators, folds weights, calls the kernel.
# All packing/folding is exact linear algebra done once, wrapper-side.
# -----------------------------------------------------------------------------
def gnnpred_pallas(node_atts, edge_index, batch, hyp_flat, p, num_graphs):
    N = int(node_atts.shape[0])
    n = int(p["emb_tab"].shape[1])
    sdim = int(p["w_fm_h"].shape[1])
    L = int(p["w_msg"].shape[0])
    B = int(num_graphs)
    dim_target = int(p["w_h1"].shape[1])

    Np = -(-N // 8) * 8                 # pad node dim to a sublane multiple
    pad_rows = Np - N

    node_oh = jax.nn.one_hot(node_atts, 11, dtype=jnp.float32)          # [N, 11]
    node_oh = jnp.pad(node_oh, ((0, pad_rows), (0, 0)))                  # [Np, 11]

    src, tgt = edge_index[0], edge_index[1]
    gsrc = jax.nn.one_hot(src, Np, dtype=jnp.float32)                    # [E, Np]
    gtgt = jax.nn.one_hot(tgt, Np, dtype=jnp.float32)                    # [E, Np]
    # Fold gather -> affine message -> scatter-add into fixed [Np,Np] operators.
    a_in = gtgt.T @ gsrc                                                 # [Np, Np]
    a_out = a_in.T                                                       # [Np, Np]
    a_stack = jnp.concatenate([a_in, a_out], axis=0)                     # [2Np, Np]
    indeg = a_in.sum(axis=1, keepdims=True)                              # [Np, 1]
    outdeg = a_out.sum(axis=1, keepdims=True)                            # [Np, 1]
    deg = jnp.concatenate([indeg, outdeg], axis=1)                       # [Np, 2]

    pmat_t = jax.nn.one_hot(batch, B, dtype=jnp.float32)                 # [N, B]
    pmat_t = jnp.pad(pmat_t, ((0, pad_rows), (0, 0)))                    # [Np, B]
    pmat = pmat_t.T                                                      # [B, Np]
    hyp = hyp_flat.astype(jnp.float32).reshape(-1, 5)                    # [B, 5]

    # --- weight folding -------------------------------------------------------
    w_msg, w_msgr = p["w_msg"], p["w_msgr"]                              # [L,2n,2n]
    w_hh, b_hh = p["w_hh"], p["b_hh"]                                    # [3L,n,n]
    w_ih, b_ih = p["w_ih"], p["b_ih"]                                    # [3L,2n,n]

    w_big_list, bias_gi_list, b_hh_list = [], [], []
    for l in range(L):
        w_ih_pack = jnp.concatenate([w_ih[3 * l], w_ih[3 * l + 1], w_ih[3 * l + 2]],
                                    axis=1)                              # [2n, 3n]
        b_ih_pack = jnp.concatenate([b_ih[3 * l], b_ih[3 * l + 1], b_ih[3 * l + 2]],
                                    axis=1)                              # [1, 3n]
        w_hh_pack = jnp.concatenate([w_hh[3 * l], w_hh[3 * l + 1], w_hh[3 * l + 2]],
                                    axis=1)                              # [n, 3n]
        b_hh_pack = jnp.concatenate([b_hh[3 * l], b_hh[3 * l + 1], b_hh[3 * l + 2]],
                                    axis=1)                              # [1, 3n]

        # aggr @ W_ih == [A_in@h | A_out@h | indeg*h | outdeg*h] @ (Wstack @ W_ih)
        w_stack = jnp.concatenate(
            [w_msg[l][:n], w_msgr[l][:n], w_msg[l][n:], w_msgr[l][n:]], axis=0)  # [4n, 2n]
        w_gi = w_stack @ w_ih_pack                                               # [4n, 3n]

        w_big = jnp.zeros((5 * n, 6 * n), jnp.float32)
        w_big = w_big.at[:4 * n, :3 * n].set(w_gi)          # input-gate block
        w_big = w_big.at[4 * n:, 3 * n:].set(w_hh_pack)     # hidden-gate block
        w_big_list.append(w_big)

        # degree-scaled message biases, pre-projected through W_ih
        b_msg_proj = p["b_msg"][l] @ w_ih_pack                           # [1, 3n]
        b_msgr_proj = p["b_msgr"][l] @ w_ih_pack                         # [1, 3n]
        bias_gi_list.append(indeg @ b_msg_proj + outdeg @ b_msgr_proj + b_ih_pack)
        b_hh_list.append(b_hh_pack)

    w_big_all = jnp.stack(w_big_list, axis=0)                            # [L, 5n, 6n]
    bias_gi_all = jnp.stack(bias_gi_list, axis=0)                        # [L, Np, 3n]
    b_hh_all = jnp.stack(b_hh_list, axis=0)                              # [L, 1, 3n]

    w_ge = jnp.concatenate(
        [jnp.concatenate([p["w_fm_h"], p["w_gm_h"]], axis=1),
         jnp.concatenate([p["w_fm_p"], p["w_gm_p"]], axis=1)], axis=0)   # [n+5, sdim+1]
    b_ge = jnp.concatenate([p["b_fm"], p["b_gm"]], axis=1)               # [1, sdim+1]

    args = (
        node_oh, a_stack, deg, pmat, pmat_t, hyp,
        p["emb_tab"], p["w_fc1"], p["b_fc1"],
        w_big_all, bias_gi_all, b_hh_all,
        w_ge, b_ge,
        p["w_h0"], p["b_h0"], p["w_h1"], p["b_h1"],
    )

    # Advisory cost estimate so XLA schedules around the custom call sensibly.
    flops = 2 * (Np * 11 * n
                 + L * (2 * Np * Np * n + Np * (5 * n) * (6 * n))
                 + B * 5 * 5 + Np * B * 5
                 + Np * (n + 5) * (sdim + 1) + B * Np * sdim
                 + B * sdim * (sdim // 2) + B * (sdim // 2) * dim_target)
    transcendentals = L * 3 * Np * n + Np
    bytes_accessed = int(sum(int(a.size) * int(a.dtype.itemsize) for a in args)
                         + B * dim_target * 4)

    # NOTE(v7x): at larger B/N add a leading "parallel" grid axis over graph
    # groups so the second TensorCore is used; at Np=64 a grid-less call is best.
    out = pl.pallas_call(
        gnnpred_kernel,
        out_shape=jax.ShapeDtypeStruct((B, dim_target), jnp.float32),
        in_specs=[pl.BlockSpec(memory_space=pltpu.MemorySpace.VMEM)] * len(args),
        out_specs=pl.BlockSpec(memory_space=pltpu.MemorySpace.VMEM),
        cost_estimate=pl.CostEstimate(flops=int(flops),
                                      transcendentals=int(transcendentals),
                                      bytes_accessed=bytes_accessed),
    )(*args)
    return out.reshape(-1)                                               # [B*dim_target]


# -----------------------------------------------------------------------------
# Deterministic parameter construction (synthetic weights, xavier-ish scale).
# -----------------------------------------------------------------------------
def make_params(key, ndim, sdim, dim_target, num_gnn_layers):
    n = ndim
    L = num_gnn_layers
    keys = iter(jax.random.split(key, 64))

    def w(shape, scale=0.1):
        return (scale * jax.random.normal(next(keys), shape)).astype(jnp.float32)

    p = {
        "emb_tab": w((11, n)),
        "w_fc1": w((5, 5)), "b_fc1": w((1, 5), 0.05),
        "w_msg": w((L, 2 * n, 2 * n)), "b_msg": w((L, 1, 2 * n), 0.05),
        "w_msgr": w((L, 2 * n, 2 * n)), "b_msgr": w((L, 1, 2 * n), 0.05),
        "w_ih": w((3 * L, 2 * n, n)), "b_ih": w((3 * L, 1, n), 0.05),
        "w_hh": w((3 * L, n, n)), "b_hh": w((3 * L, 1, n), 0.05),
        "w_fm_h": w((n, sdim)), "w_fm_p": w((5, sdim)), "b_fm": w((1, sdim), 0.05),
        "w_gm_h": w((n, 1)), "w_gm_p": w((5, 1)), "b_gm": w((1, 1), 0.05),
        "w_h0": w((sdim, sdim // 2)), "b_h0": w((1, sdim // 2), 0.05),
        "w_h1": w((sdim // 2, dim_target)), "b_h1": w((1, dim_target), 0.05),
    }
    return p


# -----------------------------------------------------------------------------
# Pure-JAX reference (mirrors the PyTorch semantics) for a correctness check.
# -----------------------------------------------------------------------------
def gnnpred_reference(node_atts, edge_index, batch, hyp_flat, p, num_graphs):
    N = node_atts.shape[0]
    L = p["w_msg"].shape[0]

    hyp = hyp_flat.astype(jnp.float32).reshape(-1, 5)
    hyp_e = jax.nn.relu(hyp @ p["w_fc1"] + p["b_fc1"][0])
    hyp_rep = jnp.repeat(hyp_e, 30, axis=0)                 # 30 nodes per graph

    h = p["emb_tab"][node_atts]
    src, tgt = edge_index[0], edge_index[1]
    src_full = jnp.concatenate([src, tgt])
    tgt_full = jnp.concatenate([tgt, src])
    E = src.shape[0]
    for l in range(L):
        h_j = h[src_full]
        h_i = h[tgt_full]
        m = jnp.concatenate([h_j, h_i], axis=1)
        a = jnp.concatenate(
            [m[:E] @ p["w_msg"][l] + p["b_msg"][l][0],
             m[E:] @ p["w_msgr"][l] + p["b_msgr"][l][0]], axis=0)
        aggr = jax.ops.segment_sum(a, tgt_full, num_segments=N)
        r = jax.nn.sigmoid(aggr @ p["w_ih"][3 * l] + p["b_ih"][3 * l][0]
                           + h @ p["w_hh"][3 * l] + p["b_hh"][3 * l][0])
        z = jax.nn.sigmoid(aggr @ p["w_ih"][3 * l + 1] + p["b_ih"][3 * l + 1][0]
                           + h @ p["w_hh"][3 * l + 1] + p["b_hh"][3 * l + 1][0])
        n_ = jnp.tanh(aggr @ p["w_ih"][3 * l + 2] + p["b_ih"][3 * l + 2][0]
                      + r * (h @ p["w_hh"][3 * l + 2] + p["b_hh"][3 * l + 2][0]))
        h = (1.0 - z) * n_ + z * h

    hcat = jnp.concatenate([h, hyp_rep], axis=1)
    w_fm = jnp.concatenate([p["w_fm_h"], p["w_fm_p"]], axis=0)
    w_gm = jnp.concatenate([p["w_gm_h"], p["w_gm_p"]], axis=0)
    h_vG = hcat @ w_fm + p["b_fm"][0]
    g_vG = jax.nn.sigmoid(hcat @ w_gm + p["b_gm"][0])
    pooled = jax.ops.segment_sum(h_vG * g_vG, batch, num_segments=num_graphs)

    r0 = jax.nn.relu(pooled @ p["w_h0"] + p["b_h0"][0])
    out = r0 @ p["w_h1"] + p["b_h1"][0]
    return out.reshape(-1)


if __name__ == "__main__":
    # Small deterministic problem: 2 graphs x 30 nodes (chain topology).
    B = 2                      # graphs in batch
    NODES_PER_GRAPH = 30       # hard-coded by the PyTorch forward (repeat(30, 1))
    N = B * NODES_PER_GRAPH    # 60 nodes
    NDIM = 16                  # dim_features
    SDIM = 32                  # dim_embedding
    DIM_TARGET = 1
    NUM_GNN_LAYERS = 2

    key = jax.random.PRNGKey(0)
    k_param, k_atts, k_hyp = jax.random.split(key, 3)

    params = make_params(k_param, NDIM, SDIM, DIM_TARGET, NUM_GNN_LAYERS)

    node_atts = jax.random.randint(k_atts, (N,), 0, 11, dtype=jnp.int32)
    # per-graph chain edges 0->1->...->29 (offset by graph)
    src = jnp.concatenate([jnp.arange(NODES_PER_GRAPH - 1, dtype=jnp.int32)
                           + g * NODES_PER_GRAPH for g in range(B)])
    tgt = src + 1
    edge_index = jnp.stack([src, tgt], axis=0)                      # [2, 58]
    batch = jnp.repeat(jnp.arange(B, dtype=jnp.int32), NODES_PER_GRAPH)
    hyperparameters = jax.random.uniform(k_hyp, (B * 5,), dtype=jnp.float32)

    acc_kernel = gnnpred_pallas(node_atts, edge_index, batch, hyperparameters,
                                params, B)
    acc_kernel = jax.block_until_ready(acc_kernel)

    acc_ref = gnnpred_reference(node_atts, edge_index, batch, hyperparameters,
                                params, B)
    acc_ref = jax.block_until_ready(acc_ref)

    # Slightly looser tolerance than v2: weight folding (Wstack @ W_ih) is an
    # exact algebraic refactor but re-associates f32 summation order.
    np.testing.assert_allclose(np.asarray(acc_kernel), np.asarray(acc_ref),
                               rtol=1e-3, atol=1e-4)
    print("KERNEL_OK")
</pallas_src>

<mosaic_0001>
module attributes {stable_mosaic.version = 11 : i64} {
  func.func @gnnpred_kernel(%arg0: memref<64x11xf32, #tpu.memory_space<vmem>>, %arg1: memref<128x64xf32, #tpu.memory_space<vmem>>, %arg2: memref<64x2xf32, #tpu.memory_space<vmem>>, %arg3: memref<2x64xf32, #tpu.memory_space<vmem>>, %arg4: memref<64x2xf32, #tpu.memory_space<vmem>>, %arg5: memref<2x5xf32, #tpu.memory_space<vmem>>, %arg6: memref<11x16xf32, #tpu.memory_space<vmem>>, %arg7: memref<5x5xf32, #tpu.memory_space<vmem>>, %arg8: memref<1x5xf32, #tpu.memory_space<vmem>>, %arg9: memref<2x80x96xf32, #tpu.memory_space<vmem>>, %arg10: memref<2x64x48xf32, #tpu.memory_space<vmem>>, %arg11: memref<2x1x48xf32, #tpu.memory_space<vmem>>, %arg12: memref<21x33xf32, #tpu.memory_space<vmem>>, %arg13: memref<1x33xf32, #tpu.memory_space<vmem>>, %arg14: memref<32x16xf32, #tpu.memory_space<vmem>>, %arg15: memref<1x16xf32, #tpu.memory_space<vmem>>, %arg16: memref<16x1xf32, #tpu.memory_space<vmem>>, %arg17: memref<1x1xf32, #tpu.memory_space<vmem>>, %arg18: memref<2x1xf32, #tpu.memory_space<vmem>>) attributes {dimension_semantics = [], scalar_prefetch = 0 : i64, scratch_operands = 0 : i64, tpu.core_type = #tpu.core_type<tc>} {
    %c0 = arith.constant 0 : index
    %c0_0 = arith.constant 0 : index
    %0 = vector.load %arg0[%c0, %c0_0] : memref<64x11xf32, #tpu.memory_space<vmem>>, vector<64x11xf32>
    %c0_1 = arith.constant 0 : index
    %c0_2 = arith.constant 0 : index
    %1 = vector.load %arg6[%c0_1, %c0_2] : memref<11x16xf32, #tpu.memory_space<vmem>>, vector<11x16xf32>
    %cst = arith.constant dense<0.000000e+00> : vector<64x16xf32>
    %2 = tpu.matmul %0, %1, %cst {dimension_numbers = #tpu.dot_dimension_numbers<[1], [0], [0], [1], [0, 0, 1, 1], [], []>} : vector<64x11xf32>, vector<11x16xf32>, vector<64x16xf32> -> vector<64x16xf32>
    %c0_3 = arith.constant 0 : index
    %c0_4 = arith.constant 0 : index
    %3 = vector.load %arg1[%c0_3, %c0_4] : memref<128x64xf32, #tpu.memory_space<vmem>>, vector<128x64xf32>
    %c0_5 = arith.constant 0 : index
    %c0_6 = arith.constant 0 : index
    %4 = vector.load %arg2[%c0_5, %c0_6] : memref<64x2xf32, #tpu.memory_space<vmem>>, vector<64x1xf32>
    %c0_7 = arith.constant 0 : index
    %c1 = arith.constant 1 : index
    %5 = vector.load %arg2[%c0_7, %c1] : memref<64x2xf32, #tpu.memory_space<vmem>>, vector<64x1xf32>
    %cst_8 = arith.constant dense<0.000000e+00> : vector<128x16xf32>
    %6 = tpu.matmul %3, %2, %cst_8 {dimension_numbers = #tpu.dot_dimension_numbers<[1], [0], [0], [1], [0, 0, 1, 1], [], []>} : vector<128x64xf32>, vector<64x16xf32>, vector<128x16xf32> -> vector<128x16xf32>
    %7 = vector.extract_strided_slice %6 {offsets = [0, 0], sizes = [64, 16], strides = [1, 1]} : vector<128x16xf32> to vector<64x16xf32>
    %8 = vector.extract_strided_slice %6 {offsets = [64, 0], sizes = [64, 16], strides = [1, 1]} : vector<128x16xf32> to vector<64x16xf32>
    %9 = vector.broadcast %4 : vector<64x1xf32> to vector<64x16xf32>
    %10 = arith.mulf %9, %2 : vector<64x16xf32>
    %11 = vector.broadcast %5 : vector<64x1xf32> to vector<64x16xf32>
    %12 = arith.mulf %11, %2 : vector<64x16xf32>
    %13 = tpu.concatenate %7, %8, %10, %12, %2 in 1 : vector<64x16xf32>, vector<64x16xf32>, vector<64x16xf32>, vector<64x16xf32>, vector<64x16xf32> -> vector<64x80xf32>
    %c0_9 = arith.constant 0 : index
    %c0_10 = arith.constant 0 : index
    %c0_11 = arith.constant 0 : index
    %14 = vector.load %arg9[%c0_9, %c0_10, %c0_11] : memref<2x80x96xf32, #tpu.memory_space<vmem>>, vector<1x80x96xf32>
    %15 = vector.shape_cast %14 : vector<1x80x96xf32> to vector<80x96xf32>
    %cst_12 = arith.constant dense<0.000000e+00> : vector<64x96xf32>
    %16 = tpu.matmul %13, %15, %cst_12 {dimension_numbers = #tpu.dot_dimension_numbers<[1], [0], [0], [1], [0, 0, 1, 1], [], []>} : vector<64x80xf32>, vector<80x96xf32>, vector<64x96xf32> -> vector<64x96xf32>
    %17 = vector.extract_strided_slice %16 {offsets = [0, 0], sizes = [64, 48], strides = [1, 1]} : vector<64x96xf32> to vector<64x48xf32>
    %c0_13 = arith.constant 0 : index
    %c0_14 = arith.constant 0 : index
    %c0_15 = arith.constant 0 : index
    %18 = vector.load %arg10[%c0_13, %c0_14, %c0_15] : memref<2x64x48xf32, #tpu.memory_space<vmem>>, vector<1x64x48xf32>
    %19 = vector.shape_cast %18 : vector<1x64x48xf32> to vector<64x48xf32>
    %20 = arith.addf %17, %19 : vector<64x48xf32>
    %21 = vector.extract_strided_slice %16 {offsets = [0, 48], sizes = [64, 48], strides = [1, 1]} : vector<64x96xf32> to vector<64x48xf32>
    %c0_16 = arith.constant 0 : index
    %c0_17 = arith.constant 0 : index
    %c0_18 = arith.constant 0 : index
    %22 = vector.load %arg11[%c0_16, %c0_17, %c0_18] : memref<2x1x48xf32, #tpu.memory_space<vmem>>, vector<1x1x48xf32>
    %23 = vector.shape_cast %22 : vector<1x1x48xf32> to vector<1x48xf32>
    %24 = vector.broadcast %23 : vector<1x48xf32> to vector<64x48xf32>
    %25 = arith.addf %21, %24 : vector<64x48xf32>
    %26 = vector.extract_strided_slice %20 {offsets = [0, 0], sizes = [64, 16], strides = [1, 1]} : vector<64x48xf32> to vector<64x16xf32>
    %27 = vector.extract_strided_slice %25 {offsets = [0, 0], sizes = [64, 16], strides = [1, 1]} : vector<64x48xf32> to vector<64x16xf32>
    %28 = arith.addf %26, %27 : vector<64x16xf32>
    %29 = arith.negf %28 : vector<64x16xf32>
    %30 = math.exp %29 : vector<64x16xf32>
    %cst_19 = arith.constant 1.000000e+00 : f32
    %31 = vector.broadcast %cst_19 : f32 to vector<64x16xf32>
    %32 = arith.addf %31, %30 : vector<64x16xf32>
    %33 = arith.divf %31, %32 : vector<64x16xf32>
    %34 = vector.extract_strided_slice %20 {offsets = [0, 16], sizes = [64, 16], strides = [1, 1]} : vector<64x48xf32> to vector<64x16xf32>
    %35 = vector.extract_strided_slice %25 {offsets = [0, 16], sizes = [64, 16], strides = [1, 1]} : vector<64x48xf32> to vector<64x16xf32>
    %36 = arith.addf %34, %35 : vector<64x16xf32>
    %37 = arith.negf %36 : vector<64x16xf32>
    %38 = math.exp %37 : vector<64x16xf32>
    %cst_20 = arith.constant 1.000000e+00 : f32
    %39 = vector.broadcast %cst_20 : f32 to vector<64x16xf32>
    %40 = arith.addf %39, %38 : vector<64x16xf32>
    %41 = arith.divf %39, %40 : vector<64x16xf32>
    %42 = vector.extract_strided_slice %20 {offsets = [0, 32], sizes = [64, 16], strides = [1, 1]} : vector<64x48xf32> to vector<64x16xf32>
    %43 = vector.extract_strided_slice %25 {offsets = [0, 32], sizes = [64, 16], strides = [1, 1]} : vector<64x48xf32> to vector<64x16xf32>
    %44 = arith.mulf %33, %43 : vector<64x16xf32>
    %45 = arith.addf %42, %44 : vector<64x16xf32>
    %46 = math.tanh %45 : vector<64x16xf32>
    %cst_21 = arith.constant 1.000000e+00 : f32
    %47 = vector.broadcast %cst_21 : f32 to vector<64x16xf32>
    %48 = arith.subf %47, %41 : vector<64x16xf32>
    %49 = arith.mulf %48, %46 : vector<64x16xf32>
    %50 = arith.mulf %41, %2 : vector<64x16xf32>
    %51 = arith.addf %49, %50 : vector<64x16xf32>
    %cst_22 = arith.constant dense<0.000000e+00> : vector<128x16xf32>
    %52 = tpu.matmul %3, %51, %cst_22 {dimension_numbers = #tpu.dot_dimension_numbers<[1], [0], [0], [1], [0, 0, 1, 1], [], []>} : vector<128x64xf32>, vector<64x16xf32>, vector<128x16xf32> -> vector<128x16xf32>
    %53 = vector.extract_strided_slice %52 {offsets = [0, 0], sizes = [64, 16], strides = [1, 1]} : vector<128x16xf32> to vector<64x16xf32>
    %54 = vector.extract_strided_slice %52 {offsets = [64, 0], sizes = [64, 16], strides = [1, 1]} : vector<128x16xf32> to vector<64x16xf32>
    %55 = vector.broadcast %4 : vector<64x1xf32> to vector<64x16xf32>
    %56 = arith.mulf %55, %51 : vector<64x16xf32>
    %57 = vector.broadcast %5 : vector<64x1xf32> to vector<64x16xf32>
    %58 = arith.mulf %57, %51 : vector<64x16xf32>
    %59 = tpu.concatenate %53, %54, %56, %58, %51 in 1 : vector<64x16xf32>, vector<64x16xf32>, vector<64x16xf32>, vector<64x16xf32>, vector<64x16xf32> -> vector<64x80xf32>
    %c1_23 = arith.constant 1 : index
    %c0_24 = arith.constant 0 : index
    %c0_25 = arith.constant 0 : index
    %60 = vector.load %arg9[%c1_23, %c0_24, %c0_25] : memref<2x80x96xf32, #tpu.memory_space<vmem>>, vector<1x80x96xf32>
    %61 = vector.shape_cast %60 : vector<1x80x96xf32> to vector<80x96xf32>
    %cst_26 = arith.constant dense<0.000000e+00> : vector<64x96xf32>
    %62 = tpu.matmul %59, %61, %cst_26 {dimension_numbers = #tpu.dot_dimension_numbers<[1], [0], [0], [1], [0, 0, 1, 1], [], []>} : vector<64x80xf32>, vector<80x96xf32>, vector<64x96xf32> -> vector<64x96xf32>
    %63 = vector.extract_strided_slice %62 {offsets = [0, 0], sizes = [64, 48], strides = [1, 1]} : vector<64x96xf32> to vector<64x48xf32>
    %c1_27 = arith.constant 1 : index
    %c0_28 = arith.constant 0 : index
    %c0_29 = arith.constant 0 : index
    %64 = vector.load %arg10[%c1_27, %c0_28, %c0_29] : memref<2x64x48xf32, #tpu.memory_space<vmem>>, vector<1x64x48xf32>
    %65 = vector.shape_cast %64 : vector<1x64x48xf32> to vector<64x48xf32>
    %66 = arith.addf %63, %65 : vector<64x48xf32>
    %67 = vector.extract_strided_slice %62 {offsets = [0, 48], sizes = [64, 48], strides = [1, 1]} : vector<64x96xf32> to vector<64x48xf32>
    %c1_30 = arith.constant 1 : index
    %c0_31 = arith.constant 0 : index
    %c0_32 = arith.constant 0 : index
    %68 = vector.load %arg11[%c1_30, %c0_31, %c0_32] : memref<2x1x48xf32, #tpu.memory_space<vmem>>, vector<1x1x48xf32>
    %69 = vector.shape_cast %68 : vector<1x1x48xf32> to vector<1x48xf32>
    %70 = vector.broadcast %69 : vector<1x48xf32> to vector<64x48xf32>
    %71 = arith.addf %67, %70 : vector<64x48xf32>
    %72 = vector.extract_strided_slice %66 {offsets = [0, 0], sizes = [64, 16], strides = [1, 1]} : vector<64x48xf32> to vector<64x16xf32>
    %73 = vector.extract_strided_slice %71 {offsets = [0, 0], sizes = [64, 16], strides = [1, 1]} : vector<64x48xf32> to vector<64x16xf32>
    %74 = arith.addf %72, %73 : vector<64x16xf32>
    %75 = arith.negf %74 : vector<64x16xf32>
    %76 = math.exp %75 : vector<64x16xf32>
    %cst_33 = arith.constant 1.000000e+00 : f32
    %77 = vector.broadcast %cst_33 : f32 to vector<64x16xf32>
    %78 = arith.addf %77, %76 : vector<64x16xf32>
    %79 = arith.divf %77, %78 : vector<64x16xf32>
    %80 = vector.extract_strided_slice %66 {offsets = [0, 16], sizes = [64, 16], strides = [1, 1]} : vector<64x48xf32> to vector<64x16xf32>
    %81 = vector.extract_strided_slice %71 {offsets = [0, 16], sizes = [64, 16], strides = [1, 1]} : vector<64x48xf32> to vector<64x16xf32>
    %82 = arith.addf %80, %81 : vector<64x16xf32>
    %83 = arith.negf %82 : vector<64x16xf32>
    %84 = math.exp %83 : vector<64x16xf32>
    %cst_34 = arith.constant 1.000000e+00 : f32
    %85 = vector.broadcast %cst_34 : f32 to vector<64x16xf32>
    %86 = arith.addf %85, %84 : vector<64x16xf32>
    %87 = arith.divf %85, %86 : vector<64x16xf32>
    %88 = vector.extract_strided_slice %66 {offsets = [0, 32], sizes = [64, 16], strides = [1, 1]} : vector<64x48xf32> to vector<64x16xf32>
    %89 = vector.extract_strided_slice %71 {offsets = [0, 32], sizes = [64, 16], strides = [1, 1]} : vector<64x48xf32> to vector<64x16xf32>
    %90 = arith.mulf %79, %89 : vector<64x16xf32>
    %91 = arith.addf %88, %90 : vector<64x16xf32>
    %92 = math.tanh %91 : vector<64x16xf32>
    %cst_35 = arith.constant 1.000000e+00 : f32
    %93 = vector.broadcast %cst_35 : f32 to vector<64x16xf32>
    %94 = arith.subf %93, %87 : vector<64x16xf32>
    %95 = arith.mulf %94, %92 : vector<64x16xf32>
    %96 = arith.mulf %87, %51 : vector<64x16xf32>
    %97 = arith.addf %95, %96 : vector<64x16xf32>
    %c0_36 = arith.constant 0 : index
    %c0_37 = arith.constant 0 : index
    %98 = vector.load %arg5[%c0_36, %c0_37] : memref<2x5xf32, #tpu.memory_space<vmem>>, vector<2x5xf32>
    %c0_38 = arith.constant 0 : index
    %c0_39 = arith.constant 0 : index
    %99 = vector.load %arg7[%c0_38, %c0_39] : memref<5x5xf32, #tpu.memory_space<vmem>>, vector<5x5xf32>
    %cst_40 = arith.constant dense<0.000000e+00> : vector<2x5xf32>
    %100 = tpu.matmul %98, %99, %cst_40 {dimension_numbers = #tpu.dot_dimension_numbers<[1], [0], [0], [1], [0, 0, 1, 1], [], []>} : vector<2x5xf32>, vector<5x5xf32>, vector<2x5xf32> -> vector<2x5xf32>
    %c0_41 = arith.constant 0 : index
    %c0_42 = arith.constant 0 : index
    %101 = vector.load %arg8[%c0_41, %c0_42] : memref<1x5xf32, #tpu.memory_space<vmem>>, vector<1x5xf32>
    %102 = vector.broadcast %101 : vector<1x5xf32> to vector<2x5xf32>
    %103 = arith.addf %100, %102 : vector<2x5xf32>
    %cst_43 = arith.constant 0.000000e+00 : f32
    %104 = vector.broadcast %cst_43 : f32 to vector<2x5xf32>
    %105 = arith.maximumf %103, %104 : vector<2x5xf32>
    %c0_44 = arith.constant 0 : index
    %c0_45 = arith.constant 0 : index
    %106 = vector.load %arg4[%c0_44, %c0_45] : memref<64x2xf32, #tpu.memory_space<vmem>>, vector<64x2xf32>
    %cst_46 = arith.constant dense<0.000000e+00> : vector<64x5xf32>
    %107 = tpu.matmul %106, %105, %cst_46 {dimension_numbers = #tpu.dot_dimension_numbers<[1], [0], [0], [1], [0, 0, 1, 1], [], []>} : vector<64x2xf32>, vector<2x5xf32>, vector<64x5xf32> -> vector<64x5xf32>
    %108 = tpu.concatenate %97, %107 in 1 : vector<64x16xf32>, vector<64x5xf32> -> vector<64x21xf32>
    %c0_47 = arith.constant 0 : index
    %c0_48 = arith.constant 0 : index
    %109 = vector.load %arg12[%c0_47, %c0_48] : memref<21x33xf32, #tpu.memory_space<vmem>>, vector<21x33xf32>
    %cst_49 = arith.constant dense<0.000000e+00> : vector<64x33xf32>
    %110 = tpu.matmul %108, %109, %cst_49 {dimension_numbers = #tpu.dot_dimension_numbers<[1], [0], [0], [1], [0, 0, 1, 1], [], []>} : vector<64x21xf32>, vector<21x33xf32>, vector<64x33xf32> -> vector<64x33xf32>
    %c0_50 = arith.constant 0 : index
    %c0_51 = arith.constant 0 : index
    %111 = vector.load %arg13[%c0_50, %c0_51] : memref<1x33xf32, #tpu.memory_space<vmem>>, vector<1x33xf32>
    %112 = vector.broadcast %111 : vector<1x33xf32> to vector<64x33xf32>
    %113 = arith.addf %110, %112 : vector<64x33xf32>
    %114 = vector.extract_strided_slice %113 {offsets = [0, 0], sizes = [64, 32], strides = [1, 1]} : vector<64x33xf32> to vector<64x32xf32>
    %115 = vector.extract_strided_slice %113 {offsets = [0, 32], sizes = [64, 1], strides = [1, 1]} : vector<64x33xf32> to vector<64x1xf32>
    %116 = arith.negf %115 : vector<64x1xf32>
    %117 = math.exp %116 : vector<64x1xf32>
    %cst_52 = arith.constant 1.000000e+00 : f32
    %118 = vector.broadcast %cst_52 : f32 to vector<64x1xf32>
    %119 = arith.addf %118, %117 : vector<64x1xf32>
    %120 = arith.divf %118, %119 : vector<64x1xf32>
    %c0_53 = arith.constant 0 : index
    %c0_54 = arith.constant 0 : index
    %121 = vector.load %arg3[%c0_53, %c0_54] : memref<2x64xf32, #tpu.memory_space<vmem>>, vector<2x64xf32>
    %122 = vector.broadcast %120 : vector<64x1xf32> to vector<64x32xf32>
    %123 = arith.mulf %114, %122 : vector<64x32xf32>
    %cst_55 = arith.constant dense<0.000000e+00> : vector<2x32xf32>
    %124 = tpu.matmul %121, %123, %cst_55 {dimension_numbers = #tpu.dot_dimension_numbers<[1], [0], [0], [1], [0, 0, 1, 1], [], []>} : vector<2x64xf32>, vector<64x32xf32>, vector<2x32xf32> -> vector<2x32xf32>
    %c0_56 = arith.constant 0 : index
    %c0_57 = arith.constant 0 : index
    %125 = vector.load %arg14[%c0_56, %c0_57] : memref<32x16xf32, #tpu.memory_space<vmem>>, vector<32x16xf32>
    %cst_58 = arith.constant dense<0.000000e+00> : vector<2x16xf32>
    %126 = tpu.matmul %124, %125, %cst_58 {dimension_numbers = #tpu.dot_dimension_numbers<[1], [0], [0], [1], [0, 0, 1, 1], [], []>} : vector<2x32xf32>, vector<32x16xf32>, vector<2x16xf32> -> vector<2x16xf32>
    %c0_59 = arith.constant 0 : index
    %c0_60 = arith.constant 0 : index
    %127 = vector.load %arg15[%c0_59, %c0_60] : memref<1x16xf32, #tpu.memory_space<vmem>>, vector<1x16xf32>
    %128 = vector.broadcast %127 : vector<1x16xf32> to vector<2x16xf32>
    %129 = arith.addf %126, %128 : vector<2x16xf32>
    %cst_61 = arith.constant 0.000000e+00 : f32
    %130 = vector.broadcast %cst_61 : f32 to vector<2x16xf32>
    %131 = arith.maximumf %129, %130 : vector<2x16xf32>
    %c0_62 = arith.constant 0 : index
    %c0_63 = arith.constant 0 : index
    %132 = vector.load %arg16[%c0_62, %c0_63] : memref<16x1xf32, #tpu.memory_space<vmem>>, vector<16x1xf32>
    %cst_64 = arith.constant dense<0.000000e+00> : vector<2x1xf32>
    %133 = tpu.matmul %131, %132, %cst_64 {dimension_numbers = #tpu.dot_dimension_numbers<[1], [0], [0], [1], [0, 0, 1, 1], [], []>} : vector<2x16xf32>, vector<16x1xf32>, vector<2x1xf32> -> vector<2x1xf32>
    %c0_65 = arith.constant 0 : index
    %c0_66 = arith.constant 0 : index
    %134 = vector.load %arg17[%c0_65, %c0_66] : memref<1x1xf32, #tpu.memory_space<vmem>>, vector<1x1xf32>
    %135 = vector.broadcast %134 : vector<1x1xf32> to vector<2x1xf32>
    %136 = arith.addf %133, %135 : vector<2x1xf32>
    %c0_67 = arith.constant 0 : index
    %c0_68 = arith.constant 0 : index
    %137 = vector.load %arg18[%c0_67, %c0_68] : memref<2x1xf32, #tpu.memory_space<vmem>>, vector<2x1xf32>
    tpu.vector_store %arg18[%c0_67, %c0_68], %136 {strides = array<i32>} : memref<2x1xf32, #tpu.memory_space<vmem>>, vector<2x1xf32>,
    return
  }
}

</mosaic_0001>

<llo_original>
// kernel: tpu_custom_call.1
$region0: #{tpu_custom_call.1}
  #allocation0 [shape = 'u32[]', space=smem, size = 0x4, offset = 0x4, fixed_abs, tag = 'smem constant byte address 0x4 - core index']
  #allocation1 [shape = 'u32[72,128]{1,0:T(1,128)}', space=vmem, size = 0x9000, scoped, tag = 'internal scratch']
  #allocation2 [shape = 'f32[1,1]{1,0:T(1,128)S(1)}', space=vmem, size = 0x200, scoped, tag = 'scoped memory for tpu_custom_call.1']
  %s0 = inlined_call_operand.vmem [shape: f32[64,11], index: 0, kind: input, shape index: {}]
  %s1 = inlined_call_operand.vmem [shape: f32[128,64], index: 1, kind: input, shape index: {}]
  %s2 = inlined_call_operand.vmem [shape: f32[64,2], index: 2, kind: input, shape index: {}]
  %s3 = inlined_call_operand.vmem [shape: f32[2,64], index: 3, kind: input, shape index: {}]
  %s4 = inlined_call_operand.vmem [shape: f32[64,2], index: 4, kind: input, shape index: {}]
  %s5 = inlined_call_operand.vmem [shape: f32[2,5], index: 5, kind: input, shape index: {}]
  %s6 = inlined_call_operand.vmem [shape: f32[11,16], index: 6, kind: input, shape index: {}]
  %s7 = inlined_call_operand.vmem [shape: f32[5,5], index: 7, kind: input, shape index: {}]
  %s8 = inlined_call_operand.vmem [shape: f32[1,5], index: 8, kind: input, shape index: {}]
  %s9 = inlined_call_operand.vmem [shape: f32[2,80,96], index: 9, kind: input, shape index: {}]
  %s10 = inlined_call_operand.vmem [shape: f32[2,64,48], index: 10, kind: input, shape index: {}]
  %s11 = inlined_call_operand.vmem [shape: f32[2,1,48], index: 11, kind: input, shape index: {}]
  %s12 = inlined_call_operand.vmem [shape: f32[21,33], index: 12, kind: input, shape index: {}]
  %s13 = inlined_call_operand.vmem [shape: f32[1,33], index: 13, kind: input, shape index: {}]
  %s14 = inlined_call_operand.vmem [shape: f32[32,16], index: 14, kind: input, shape index: {}]
  %s15 = inlined_call_operand.vmem [shape: f32[1,16], index: 15, kind: input, shape index: {}]
  %s16 = inlined_call_operand.vmem [shape: f32[16,1], index: 16, kind: input, shape index: {}]
  %s17 = inlined_call_operand.<no memory space> [shape: f32[1,1], index: 17, kind: input, shape index: {}]
  %s18 = inlined_call_operand.vmem [shape: f32[2,1], index: 18, kind: output, shape index: {}]
  %s19 = sld [smem:[#allocation0]]
  $region82: #{tpu_custom_call.1} parent=0
    _
  %s21 = ssub.s32 1, %s19
  %s22 = scalar_select 0, %s21, %s19
  %v23 = vstv %s17
  %24 = vst [vmem:[#allocation2] sm:$0x1] %v23
  // Predicated region
  $region2: #{tpu_custom_call.1} parent=0 // pred_check
    _
  $region3: #{tpu_custom_call.1} parent=0 // pred_check_branch
    %26 = sbr.rel (0) target = $region5
  $region4: #{tpu_custom_call.1} parent=0 // pred_region
    _
  $region5: #{tpu_custom_call.1} parent=0 // pred_fallthru
    _
  // Predicated region
  $region6: #{tpu_custom_call.1} parent=0 // pred_check
    _
  $region7: #{tpu_custom_call.1} parent=0 // pred_check_branch
    %28 = sbr.rel (0) target = $region9
  $region8: #{tpu_custom_call.1} parent=0 // pred_region
    _
  $region9: #{tpu_custom_call.1} parent=0 // pred_fallthru
    _
  // Predicated region
  $region10: #{tpu_custom_call.1} parent=0 // pred_check
    _
  $region11: #{tpu_custom_call.1} parent=0 // pred_check_branch
    %30 = sbr.rel (0) target = $region13
  $region12: #{tpu_custom_call.1} parent=0 // pred_region
    _
  $region13: #{tpu_custom_call.1} parent=0 // pred_fallthru
    _
  // Predicated region
  $region14: #{tpu_custom_call.1} parent=0 // pred_check
    _
  $region15: #{tpu_custom_call.1} parent=0 // pred_check_branch
    %32 = sbr.rel (0) target = $region17
  $region16: #{tpu_custom_call.1} parent=0 // pred_region
    _
  $region17: #{tpu_custom_call.1} parent=0 // pred_fallthru
    _
  // Predicated region
  $region18: #{tpu_custom_call.1} parent=0 // pred_check
    _
  $region19: #{tpu_custom_call.1} parent=0 // pred_check_branch
    %34 = sbr.rel (0) target = $region21
  $region20: #{tpu_custom_call.1} parent=0 // pred_region
    _
  $region21: #{tpu_custom_call.1} parent=0 // pred_fallthru
    _
  // Predicated region
  $region22: #{tpu_custom_call.1} parent=0 // pred_check
    _
  $region23: #{tpu_custom_call.1} parent=0 // pred_check_branch
    %36 = sbr.rel (0) target = $region25
  $region24: #{tpu_custom_call.1} parent=0 // pred_region
    _
  $region25: #{tpu_custom_call.1} parent=0 // pred_fallthru
    _
  // Predicated region
  $region26: #{tpu_custom_call.1} parent=0 // pred_check
    _
  $region27: #{tpu_custom_call.1} parent=0 // pred_check_branch
    %38 = sbr.rel (0) target = $region29
  $region28: #{tpu_custom_call.1} parent=0 // pred_region
    _
  $region29: #{tpu_custom_call.1} parent=0 // pred_fallthru
    _
  // Predicated region
  $region30: #{tpu_custom_call.1} parent=0 // pred_check
    _
  $region31: #{tpu_custom_call.1} parent=0 // pred_check_branch
    %40 = sbr.rel (0) target = $region33
  $region32: #{tpu_custom_call.1} parent=0 // pred_region
    _
  $region33: #{tpu_custom_call.1} parent=0 // pred_fallthru
    _
  // Predicated region
  $region34: #{tpu_custom_call.1} parent=0 // pred_check
    _
  $region35: #{tpu_custom_call.1} parent=0 // pred_check_branch
    %42 = sbr.rel (0) target = $region37
  $region36: #{tpu_custom_call.1} parent=0 // pred_region
    _
  $region37: #{tpu_custom_call.1} parent=0 // pred_fallthru
    _
  // Predicated region
  $region38: #{tpu_custom_call.1} parent=0 // pred_check
    _
  $region39: #{tpu_custom_call.1} parent=0 // pred_check_branch
    %44 = sbr.rel (0) target = $region41
  $region40: #{tpu_custom_call.1} parent=0 // pred_region
    _
  $region41: #{tpu_custom_call.1} parent=0 // pred_fallthru
    _
  // Predicated region
  $region42: #{tpu_custom_call.1} parent=0 // pred_check
    _
  $region43: #{tpu_custom_call.1} parent=0 // pred_check_branch
    %46 = sbr.rel (0) target = $region45
  $region44: #{tpu_custom_call.1} parent=0 // pred_region
    _
  $region45: #{tpu_custom_call.1} parent=0 // pred_fallthru
    _
  // Predicated region
  $region46: #{tpu_custom_call.1} parent=0 // pred_check
    _
  $region47: #{tpu_custom_call.1} parent=0 // pred_check_branch
    %48 = sbr.rel (0) target = $region49
  $region48: #{tpu_custom_call.1} parent=0 // pred_region
    _
  $region49: #{tpu_custom_call.1} parent=0 // pred_fallthru
    _
  // Predicated region
  $region50: #{tpu_custom_call.1} parent=0 // pred_check
    _
  $region51: #{tpu_custom_call.1} parent=0 // pred_check_branch
    %50 = sbr.rel (0) target = $region53
  $region52: #{tpu_custom_call.1} parent=0 // pred_region
    _
  $region53: #{tpu_custom_call.1} parent=0 // pred_fallthru
    _
  // Predicated region
  $region54: #{tpu_custom_call.1} parent=0 // pred_check
    _
  $region55: #{tpu_custom_call.1} parent=0 // pred_check_branch
    %52 = sbr.rel (0) target = $region57
  $region56: #{tpu_custom_call.1} parent=0 // pred_region
    _
  $region57: #{tpu_custom_call.1} parent=0 // pred_fallthru
    _
  // Predicated region
  $region58: #{tpu_custom_call.1} parent=0 // pred_check
    _
  $region59: #{tpu_custom_call.1} parent=0 // pred_check_branch
    %54 = sbr.rel (0) target = $region61
  $region60: #{tpu_custom_call.1} parent=0 // pred_region
    _
  $region61: #{tpu_custom_call.1} parent=0 // pred_fallthru
    _
  // Predicated region
  $region62: #{tpu_custom_call.1} parent=0 // pred_check
    _
  $region63: #{tpu_custom_call.1} parent=0 // pred_check_branch
    %56 = sbr.rel (0) target = $region65
  $region64: #{tpu_custom_call.1} parent=0 // pred_region
    _
  $region65: #{tpu_custom_call.1} parent=0 // pred_fallthru
    _
  // Predicated region
  $region66: #{tpu_custom_call.1} parent=0 // pred_check
    _
  $region67: #{tpu_custom_call.1} parent=0 // pred_check_branch
    %58 = sbr.rel (0) target = $region69
  $region68: #{tpu_custom_call.1} parent=0 // pred_region
    _
  $region69: #{tpu_custom_call.1} parent=0 // pred_fallthru
    _
  // Predicated region
  $region70: #{tpu_custom_call.1} parent=0 // pred_check
    _
  $region71: #{tpu_custom_call.1} parent=0 // pred_check_branch
    %60 = sbr.rel (0) target = $region73
  $region72: #{tpu_custom_call.1} parent=0 // pred_region
    _
  $region73: #{tpu_custom_call.1} parent=0 // pred_fallthru
    _
  %v61 = vld [vmem:[%s0] sm:$0xff]
  %v62 = vld [vmem:[%s0 + $0x8] sm:$0xff]
  %v63 = vld [vmem:[%s0 + $0x10] sm:$0xff]
  %v64 = vld [vmem:[%s0 + $0x18] sm:$0xff]
  %v65 = vld [vmem:[%s0 + $0x20] sm:$0xff]
  %v66 = vld [vmem:[%s0 + $0x28] sm:$0xff]
  %v67 = vld [vmem:[%s0 + $0x30] sm:$0xff]
  %v68 = vld [vmem:[%s0 + $0x38] sm:$0xff]
  %v69 = vld [vmem:[%s6] sm:$0xff]
  %v70 = vld [vmem:[%s6 + $0x8] sm:$0x7]
  %vm71 = vcmask 89088
  %v73 = vsel %vm71, %v61, 0
  %v76 = vsel %vm71, %v62, 0
  %v79 = vsel %vm71, %v63, 0
  %v82 = vsel %vm71, %v64, 0
  %v85 = vsel %vm71, %v65, 0
  %v88 = vsel %vm71, %v66, 0
  %v91 = vsel %vm71, %v67, 0
  %v94 = vsel %vm71, %v68, 0
  %vm96 = vcmask 1042432
  %v98 = vsel %vm96, %v70, 0
  %100 = vmatpush.msra.mxu0 0.0
  %101 = vmatpush.msra.mxu0 0.0
  %102 = vmatpush.msra.mxu0 0.0
  %103 = vmatpush.msra.mxu0 0.0
  %104 = vmatpush.msra.mxu0 0.0
  %105 = vmatpush.msra.mxu0 0.0
  %106 = vmatpush.msra.mxu0 0.0
  %107 = vmatpush.msra.mxu0 0.0
  %108 = vmatpush.msra.mxu0 0.0
  %109 = vmatpush.msra.mxu0 0.0
  %110 = vmatpush.msra.mxu0 0.0
  %111 = vmatpush.msra.mxu0 0.0
  %112 = vmatpush.msra.mxu0 0.0
  %113 = vmatpush.msra.mxu0 0.0
  %114 = vmatpush.msra.mxu0 %v98
  %115 = vmatpush.msra.mxu0 %v69
  %116 = vmatmul.f32.gmra.mxu0 %v73
  %v117 = vpop.f32.mrf.mxu0
  %v118 = vadd.f32 0.0, %v117
  %119 = vmatmul.f32.gmra.mxu0 %v76
  %v120 = vpop.f32.mrf.mxu0
  %v121 = vadd.f32 0.0, %v120
  %122 = vmatmul.f32.gmra.mxu0 %v79
  %v123 = vpop.f32.mrf.mxu0
  %v124 = vadd.f32 0.0, %v123
  %125 = vmatmul.f32.gmra.mxu0 %v82
  %v126 = vpop.f32.mrf.mxu0
  %v127 = vadd.f32 0.0, %v126
  %128 = vmatmul.f32.gmra.mxu0 %v85
  %v129 = vpop.f32.mrf.mxu0
  %v130 = vadd.f32 0.0, %v129
  %131 = vmatmul.f32.gmra.mxu0 %v88
  %v132 = vpop.f32.mrf.mxu0
  %v133 = vadd.f32 0.0, %v132
  %134 = vmatmul.f32.gmra.mxu0 %v91
  %v135 = vpop.f32.mrf.mxu0
  %v136 = vadd.f32 0.0, %v135
  %137 = vmatmul.f32.gmra.mxu0 %v94
  %v138 = vpop.f32.mrf.mxu0
  %v139 = vadd.f32 0.0, %v138
  %140 = vdwg.mxu0
  %v141 = vld [vmem:[%s1] sm:$0xff]
  %v142 = vld [vmem:[%s1 + $0x8] sm:$0xff]
  %v143 = vld [vmem:[%s1 + $0x10] sm:$0xff]
  %v144 = vld [vmem:[%s1 + $0x18] sm:$0xff]
  %v145 = vld [vmem:[%s1 + $0x20] sm:$0xff]
  %v146 = vld [vmem:[%s1 + $0x28] sm:$0xff]
  %v147 = vld [vmem:[%s1 + $0x30] sm:$0xff]
  %v148 = vld [vmem:[%s1 + $0x38] sm:$0xff]
  %v149 = vld [vmem:[%s1 + $0x40] sm:$0xff]
  %v150 = vld [vmem:[%s1 + $0x48] sm:$0xff]
  %v151 = vld [vmem:[%s1 + $0x50] sm:$0xff]
  %v152 = vld [vmem:[%s1 + $0x58] sm:$0xff]
  %v153 = vld [vmem:[%s1 + $0x60] sm:$0xff]
  %v154 = vld [vmem:[%s1 + $0x68] sm:$0xff]
  %v155 = vld [vmem:[%s1 + $0x70] sm:$0xff]
  %v156 = vld [vmem:[%s1 + $0x78] sm:$0xff]
  %v157 = vld [vmem:[%s2] sm:$0xff]
  %v158 = vld [vmem:[%s2 + $0x8] sm:$0xff]
  %v159 = vld [vmem:[%s2 + $0x10] sm:$0xff]
  %v160 = vld [vmem:[%s2 + $0x18] sm:$0xff]
  %v161 = vld [vmem:[%s2 + $0x20] sm:$0xff]
  %v162 = vld [vmem:[%s2 + $0x28] sm:$0xff]
  %v163 = vld [vmem:[%s2 + $0x30] sm:$0xff]
  %v164 = vld [vmem:[%s2 + $0x38] sm:$0xff]
  %vm165 = vcmask 523264
  %v167 = vsel %vm165, %v141, 0
  %v170 = vsel %vm165, %v142, 0
  %v173 = vsel %vm165, %v143, 0
  %v176 = vsel %vm165, %v144, 0
  %v179 = vsel %vm165, %v145, 0
  %v182 = vsel %vm165, %v146, 0
  %v185 = vsel %vm165, %v147, 0
  %v188 = vsel %vm165, %v148, 0
  %v191 = vsel %vm165, %v149, 0
  %v194 = vsel %vm165, %v150, 0
  %v197 = vsel %vm165, %v151, 0
  %v200 = vsel %vm165, %v152, 0
  %v203 = vsel %vm165, %v153, 0
  %v206 = vsel %vm165, %v154, 0
  %v209 = vsel %vm165, %v155, 0
  %v212 = vsel %vm165, %v156, 0
  %214 = vmatpush.msra.mxu0 0.0
  %215 = vmatpush.msra.mxu0 0.0
  %216 = vmatpush.msra.mxu0 0.0
  %217 = vmatpush.msra.mxu0 0.0
  %218 = vmatpush.msra.mxu0 0.0
  %219 = vmatpush.msra.mxu0 0.0
  %220 = vmatpush.msra.mxu0 0.0
  %221 = vmatpush.msra.mxu0 0.0
  %222 = vmatpush.msra.mxu0 %v139
  %223 = vmatpush.msra.mxu0 %v136
  %224 = vmatpush.msra.mxu0 %v133
  %225 = vmatpush.msra.mxu0 %v130
  %226 = vmatpush.msra.mxu0 %v127
  %227 = vmatpush.msra.mxu0 %v124
  %228 = vmatpush.msra.mxu0 %v121
  %229 = vmatpush.msra.mxu0 %v118
  %230 = vmatmul.f32.gmra.mxu0 %v167
  %v231 = vpop.f32.mrf.mxu0
  %v232 = vadd.f32 0.0, %v231
  %233 = vmatmul.f32.gmra.mxu0 %v170
  %v234 = vpop.f32.mrf.mxu0
  %v235 = vadd.f32 0.0, %v234
  %236 = vmatmul.f32.gmra.mxu0 %v173
  %v237 = vpop.f32.mrf.mxu0
  %v238 = vadd.f32 0.0, %v237
  %239 = vmatmul.f32.gmra.mxu0 %v176
  %v240 = vpop.f32.mrf.mxu0
  %v241 = vadd.f32 0.0, %v240
  %242 = vmatmul.f32.gmra.mxu0 %v179
  %v243 = vpop.f32.mrf.mxu0
  %v244 = vadd.f32 0.0, %v243
  %245 = vmatmul.f32.gmra.mxu0 %v182
  %v246 = vpop.f32.mrf.mxu0
  %v247 = vadd.f32 0.0, %v246
  %248 = vmatmul.f32.gmra.mxu0 %v185
  %v249 = vpop.f32.mrf.mxu0
  %v250 = vadd.f32 0.0, %v249
  %251 = vmatmul.f32.gmra.mxu0 %v188
  %v252 = vpop.f32.mrf.mxu0
  %v253 = vadd.f32 0.0, %v252
  %254 = vmatmul.f32.gmra.mxu0 %v191
  %v255 = vpop.f32.mrf.mxu0
  %v256 = vadd.f32 0.0, %v255
  %257 = vmatmul.f32.gmra.mxu0 %v194
  %v258 = vpop.f32.mrf.mxu0
  %v259 = vadd.f32 0.0, %v258
  %260 = vmatmul.f32.gmra.mxu0 %v197
  %v261 = vpop.f32.mrf.mxu0
  %v262 = vadd.f32 0.0, %v261
  %263 = vmatmul.f32.gmra.mxu0 %v200
  %v264 = vpop.f32.mrf.mxu0
  %v265 = vadd.f32 0.0, %v264
  %266 = vmatmul.f32.gmra.mxu0 %v203
  %v267 = vpop.f32.mrf.mxu0
  %v268 = vadd.f32 0.0, %v267
  %269 = vmatmul.f32.gmra.mxu0 %v206
  %v270 = vpop.f32.mrf.mxu0
  %v271 = vadd.f32 0.0, %v270
  %272 = vmatmul.f32.gmra.mxu0 %v209
  %v273 = vpop.f32.mrf.mxu0
  %v274 = vadd.f32 0.0, %v273
  %275 = vmatmul.f32.gmra.mxu0 %v212
  %v276 = vpop.f32.mrf.mxu0
  %v277 = vadd.f32 0.0, %v276
  %278 = vdwg.mxu0
  %280 = vset.pattern.permute.xlu0 0
  %281 = vperm.xlu0 %280, %v157
  %v282 = vpop.permute.xlu0 %281
  %285 = vset.pattern.permute.xlu0 0
  %286 = vperm.xlu0 %285, %v158
  %v287 = vpop.permute.xlu0 %286
  %290 = vset.pattern.permute.xlu0 0
  %291 = vperm.xlu0 %290, %v159
  %v292 = vpop.permute.xlu0 %291
  %295 = vset.pattern.permute.xlu0 0
  %296 = vperm.xlu0 %295, %v160
  %v297 = vpop.permute.xlu0 %296
  %300 = vset.pattern.permute.xlu0 0
  %301 = vperm.xlu0 %300, %v161
  %v302 = vpop.permute.xlu0 %301
  %305 = vset.pattern.permute.xlu0 0
  %306 = vperm.xlu0 %305, %v162
  %v307 = vpop.permute.xlu0 %306
  %310 = vset.pattern.permute.xlu0 0
  %311 = vperm.xlu0 %310, %v163
  %v312 = vpop.permute.xlu0 %311
  %315 = vset.pattern.permute.xlu0 0
  %316 = vperm.xlu0 %315, %v164
  %v317 = vpop.permute.xlu0 %316
  %v319 = vmul.f32 %v282, %v118
  %v320 = vmul.f32 %v287, %v121
  %v321 = vmul.f32 %v292, %v124
  %v322 = vmul.f32 %v297, %v127
  %v323 = vmul.f32 %v302, %v130
  %v324 = vmul.f32 %v307, %v133
  %v325 = vmul.f32 %v312, %v136
  %v326 = vmul.f32 %v317, %v139
  %327 = vset.pattern.permute.xlu0 1
  %328 = vperm.xlu0 %327, %v157
  %v329 = vpop.permute.xlu0 %328
  %331 = vset.pattern.permute.xlu0 1
  %332 = vperm.xlu0 %331, %v158
  %v333 = vpop.permute.xlu0 %332
  %335 = vset.pattern.permute.xlu0 1
  %336 = vperm.xlu0 %335, %v159
  %v337 = vpop.permute.xlu0 %336
  %339 = vset.pattern.permute.xlu0 1
  %340 = vperm.xlu0 %339, %v160
  %v341 = vpop.permute.xlu0 %340
  %343 = vset.pattern.permute.xlu0 1
  %344 = vperm.xlu0 %343, %v161
  %v345 = vpop.permute.xlu0 %344
  %347 = vset.pattern.permute.xlu0 1
  %348 = vperm.xlu0 %347, %v162
  %v349 = vpop.permute.xlu0 %348
  %351 = vset.pattern.permute.xlu0 1
  %352 = vperm.xlu0 %351, %v163
  %v353 = vpop.permute.xlu0 %352
  %355 = vset.pattern.permute.xlu0 1
  %356 = vperm.xlu0 %355, %v164
  %v357 = vpop.permute.xlu0 %356
  %v359 = vmul.f32 %v329, %v118
  %v360 = vmul.f32 %v333, %v121
  %v361 = vmul.f32 %v337, %v124
  %v362 = vmul.f32 %v341, %v127
  %v363 = vmul.f32 %v345, %v130
  %v364 = vmul.f32 %v349, %v133
  %v365 = vmul.f32 %v353, %v136
  %v366 = vmul.f32 %v357, %v139
  %375 = vrot.lane.b32.xlu0 %v256, 16
  %v376 = vpop.permute.xlu0 %375
  %377 = vrot.lane.b32.xlu0 %v259, 16
  %v378 = vpop.permute.xlu0 %377
  %379 = vrot.lane.b32.xlu0 %v262, 16
  %v380 = vpop.permute.xlu0 %379
  %381 = vrot.lane.b32.xlu0 %v265, 16
  %v382 = vpop.permute.xlu0 %381
  %383 = vrot.lane.b32.xlu0 %v268, 16
  %v384 = vpop.permute.xlu0 %383
  %385 = vrot.lane.b32.xlu0 %v271, 16
  %v386 = vpop.permute.xlu0 %385
  %387 = vrot.lane.b32.xlu0 %v274, 16
  %v388 = vpop.permute.xlu0 %387
  %389 = vrot.lane.b32.xlu0 %v277, 16
  %v390 = vpop.permute.xlu0 %389
  %407 = vrot.lane.b32.xlu0 %v319, 32
  %v408 = vpop.permute.xlu0 %407
  %409 = vrot.lane.b32.xlu0 %v320, 32
  %v410 = vpop.permute.xlu0 %409
  %411 = vrot.lane.b32.xlu0 %v321, 32
  %v412 = vpop.permute.xlu0 %411
  %413 = vrot.lane.b32.xlu0 %v322, 32
  %v414 = vpop.permute.xlu0 %413
  %415 = vrot.lane.b32.xlu0 %v323, 32
  %v416 = vpop.permute.xlu0 %415
  %417 = vrot.lane.b32.xlu0 %v324, 32
  %v418 = vpop.permute.xlu0 %417
  %419 = vrot.lane.b32.xlu0 %v325, 32
  %v420 = vpop.permute.xlu0 %419
  %421 = vrot.lane.b32.xlu0 %v326, 32
  %v422 = vpop.permute.xlu0 %421
  %439 = vrot.lane.b32.xlu0 %v359, 48
  %v440 = vpop.permute.xlu0 %439
  %441 = vrot.lane.b32.xlu0 %v360, 48
  %v442 = vpop.permute.xlu0 %441
  %443 = vrot.lane.b32.xlu0 %v361, 48
  %v444 = vpop.permute.xlu0 %443
  %445 = vrot.lane.b32.xlu0 %v362, 48
  %v446 = vpop.permute.xlu0 %445
  %447 = vrot.lane.b32.xlu0 %v363, 48
  %v448 = vpop.permute.xlu0 %447
  %449 = vrot.lane.b32.xlu0 %v364, 48
  %v450 = vpop.permute.xlu0 %449
  %451 = vrot.lane.b32.xlu0 %v365, 48
  %v452 = vpop.permute.xlu0 %451
  %453 = vrot.lane.b32.xlu0 %v366, 48
  %v454 = vpop.permute.xlu0 %453
  %471 = vrot.lane.b32.xlu0 %v118, 64
  %v472 = vpop.permute.xlu0 %471
  %473 = vrot.lane.b32.xlu0 %v121, 64
  %v474 = vpop.permute.xlu0 %473
  %475 = vrot.lane.b32.xlu0 %v124, 64
  %v476 = vpop.permute.xlu0 %475
  %477 = vrot.lane.b32.xlu0 %v127, 64
  %v478 = vpop.permute.xlu0 %477
  %479 = vrot.lane.b32.xlu0 %v130, 64
  %v480 = vpop.permute.xlu0 %479
  %481 = vrot.lane.b32.xlu0 %v133, 64
  %v482 = vpop.permute.xlu0 %481
  %483 = vrot.lane.b32.xlu0 %v136, 64
  %v484 = vpop.permute.xlu0 %483
  %485 = vrot.lane.b32.xlu0 %v139, 64
  %v486 = vpop.permute.xlu0 %485
  %vm495 = vcmask 130048
  %v496 = vsel %vm495, %v232, %v376
  %v497 = vsel %vm495, %v235, %v378
  %v498 = vsel %vm495, %v238, %v380
  %v499 = vsel %vm495, %v241, %v382
  %v500 = vsel %vm495, %v244, %v384
  %v501 = vsel %vm495, %v247, %v386
  %v502 = vsel %vm495, %v250, %v388
  %v503 = vsel %vm495, %v253, %v390
  %vm504 = vcmask 261120
  %v505 = vsel %vm504, %v496, %v408
  %v506 = vsel %vm504, %v497, %v410
  %v507 = vsel %vm504, %v498, %v412
  %v508 = vsel %vm504, %v499, %v414
  %v509 = vsel %vm504, %v500, %v416
  %v510 = vsel %vm504, %v501, %v418
  %v511 = vsel %vm504, %v502, %v420
  %v512 = vsel %vm504, %v503, %v422
  %vm513 = vcmask 392192
  %v514 = vsel %vm513, %v505, %v440
  %v515 = vsel %vm513, %v506, %v442
  %v516 = vsel %vm513, %v507, %v444
  %v517 = vsel %vm513, %v508, %v446
  %v518 = vsel %vm513, %v509, %v448
  %v519 = vsel %vm513, %v510, %v450
  %v520 = vsel %vm513, %v511, %v452
  %v521 = vsel %vm513, %v512, %v454
  %v522 = vsel %vm165, %v514, %v472
  %v523 = vsel %vm165, %v515, %v474
  %v524 = vsel %vm165, %v516, %v476
  %v525 = vsel %vm165, %v517, %v478
  %v526 = vsel %vm165, %v518, %v480
  %v527 = vsel %vm165, %v519, %v482
  %v528 = vsel %vm165, %v520, %v484
  %v529 = vsel %vm165, %v521, %v486
  %v530 = vld [vmem:[%s9] sm:$0xff]
  %v531 = vld [vmem:[%s9 + $0x8] sm:$0xff]
  %v532 = vld [vmem:[%s9 + $0x10] sm:$0xff]
  %v533 = vld [vmem:[%s9 + $0x18] sm:$0xff]
  %v534 = vld [vmem:[%s9 + $0x20] sm:$0xff]
  %v535 = vld [vmem:[%s9 + $0x28] sm:$0xff]
  %v536 = vld [vmem:[%s9 + $0x30] sm:$0xff]
  %v537 = vld [vmem:[%s9 + $0x38] sm:$0xff]
  %v538 = vld [vmem:[%s9 + $0x40] sm:$0xff]
  %v539 = vld [vmem:[%s9 + $0x48] sm:$0xff]
  %vm540 = vcmask 654336
  %v542 = vsel %vm540, %v522, 0
  %v545 = vsel %vm540, %v523, 0
  %v548 = vsel %vm540, %v524, 0
  %v551 = vsel %vm540, %v525, 0
  %v554 = vsel %vm540, %v526, 0
  %v557 = vsel %vm540, %v527, 0
  %v560 = vsel %vm540, %v528, 0
  %v563 = vsel %vm540, %v529, 0
  %565 = vmatpush.msra.mxu0 0.0
  %566 = vmatpush.msra.mxu0 0.0
  %567 = vmatpush.msra.mxu0 0.0
  %568 = vmatpush.msra.mxu0 0.0
  %569 = vmatpush.msra.mxu0 0.0
  %570 = vmatpush.msra.mxu0 0.0
  %571 = vmatpush.msra.mxu0 %v539
  %572 = vmatpush.msra.mxu0 %v538
  %573 = vmatpush.msra.mxu0 %v537
  %574 = vmatpush.msra.mxu0 %v536
  %575 = vmatpush.msra.mxu0 %v535
  %576 = vmatpush.msra.mxu0 %v534
  %577 = vmatpush.msra.mxu0 %v533
  %578 = vmatpush.msra.mxu0 %v532
  %579 = vmatpush.msra.mxu0 %v531
  %580 = vmatpush.msra.mxu0 %v530
  %581 = vmatmul.f32.gmra.mxu0 %v542
  %v582 = vpop.f32.mrf.mxu0
  %v583 = vadd.f32 0.0, %v582
  %584 = vmatmul.f32.gmra.mxu0 %v545
  %v585 = vpop.f32.mrf.mxu0
  %v586 = vadd.f32 0.0, %v585
  %587 = vmatmul.f32.gmra.mxu0 %v548
  %v588 = vpop.f32.mrf.mxu0
  %v589 = vadd.f32 0.0, %v588
  %590 = vmatmul.f32.gmra.mxu0 %v551
  %v591 = vpop.f32.mrf.mxu0
  %v592 = vadd.f32 0.0, %v591
  %593 = vmatmul.f32.gmra.mxu0 %v554
  %v594 = vpop.f32.mrf.mxu0
  %v595 = vadd.f32 0.0, %v594
  %596 = vmatmul.f32.gmra.mxu0 %v557
  %v597 = vpop.f32.mrf.mxu0
  %v598 = vadd.f32 0.0, %v597
  %599 = vmatmul.f32.gmra.mxu0 %v560
  %v600 = vpop.f32.mrf.mxu0
  %v601 = vadd.f32 0.0, %v600
  %602 = vmatmul.f32.gmra.mxu0 %v563
  %v603 = vpop.f32.mrf.mxu0
  %v604 = vadd.f32 0.0, %v603
  %605 = vdwg.mxu0
  %v606 = vld [vmem:[%s10] sm:$0xff]
  %v607 = vld [vmem:[%s10 + $0x8] sm:$0xff]
  %v608 = vld [vmem:[%s10 + $0x10] sm:$0xff]
  %v609 = vld [vmem:[%s10 + $0x18] sm:$0xff]
  %v610 = vld [vmem:[%s10 + $0x20] sm:$0xff]
  %v611 = vld [vmem:[%s10 + $0x28] sm:$0xff]
  %v612 = vld [vmem:[%s10 + $0x30] sm:$0xff]
  %v613 = vld [vmem:[%s10 + $0x38] sm:$0xff]
  %v614 = vadd.f32 %v583, %v606
  %v615 = vadd.f32 %v586, %v607
  %v616 = vadd.f32 %v589, %v608
  %v617 = vadd.f32 %v592, %v609
  %v618 = vadd.f32 %v595, %v610
  %v619 = vadd.f32 %v598, %v611
  %v620 = vadd.f32 %v601, %v612
  %v621 = vadd.f32 %v604, %v613
  %v622 = vld [vmem:[%s11] sm:$0x1]
  %v624 = vperm.slane %v622, 0
  %625 = vrot.lane.b32.xlu0 %v624, 48
  %v626 = vpop.permute.xlu0 %625
  %v628 = vadd.f32 %v583, %v626
  %v629 = vadd.f32 %v586, %v626
  %v630 = vadd.f32 %v589, %v626
  %v631 = vadd.f32 %v592, %v626
  %v632 = vadd.f32 %v595, %v626
  %v633 = vadd.f32 %v598, %v626
  %v634 = vadd.f32 %v601, %v626
  %v635 = vadd.f32 %v604, %v626
  %644 = vrot.lane.b32.xlu0 %v628, 80
  %v645 = vpop.permute.xlu0 %644
  %646 = vrot.lane.b32.xlu0 %v629, 80
  %v647 = vpop.permute.xlu0 %646
  %648 = vrot.lane.b32.xlu0 %v630, 80
  %v649 = vpop.permute.xlu0 %648
  %650 = vrot.lane.b32.xlu0 %v631, 80
  %v651 = vpop.permute.xlu0 %650
  %652 = vrot.lane.b32.xlu0 %v632, 80
  %v653 = vpop.permute.xlu0 %652
  %654 = vrot.lane.b32.xlu0 %v633, 80
  %v655 = vpop.permute.xlu0 %654
  %656 = vrot.lane.b32.xlu0 %v634, 80
  %v657 = vpop.permute.xlu0 %656
  %658 = vrot.lane.b32.xlu0 %v635, 80
  %v659 = vpop.permute.xlu0 %658
  %v668 = vadd.f32 %v614, %v645
  %v669 = vadd.f32 %v615, %v647
  %v670 = vadd.f32 %v616, %v649
  %v671 = vadd.f32 %v617, %v651
  %v672 = vadd.f32 %v618, %v653
  %v673 = vadd.f32 %v619, %v655
  %v674 = vadd.f32 %v620, %v657
  %v675 = vadd.f32 %v621, %v659
  %v676 = vxor.u32 %v668, 2147483648
  %v677 = vxor.u32 %v669, 2147483648
  %v678 = vxor.u32 %v670, 2147483648
  %v679 = vxor.u32 %v671, 2147483648
  %v680 = vxor.u32 %v672, 2147483648
  %v681 = vxor.u32 %v673, 2147483648
  %v682 = vxor.u32 %v674, 2147483648
  %v683 = vxor.u32 %v675, 2147483648
  %v684 = vmul.f32 %v676, 1.442695
  %v685 = vpow.pop %v684
  %v686 = vmul.f32 %v677, 1.442695
  %v687 = vpow.pop %v686
  %v688 = vmul.f32 %v678, 1.442695
  %v689 = vpow.pop %v688
  %v690 = vmul.f32 %v679, 1.442695
  %v691 = vpow.pop %v690
  %v692 = vmul.f32 %v680, 1.442695
  %v693 = vpow.pop %v692
  %v694 = vmul.f32 %v681, 1.442695
  %v695 = vpow.pop %v694
  %v696 = vmul.f32 %v682, 1.442695
  %v697 = vpow.pop %v696
  %v698 = vmul.f32 %v683, 1.442695
  %v699 = vpow.pop %v698
  %v700 = vadd.f32 %v685, 1.0
  %v701 = vadd.f32 %v687, 1.0
  %v702 = vadd.f32 %v689, 1.0
  %v703 = vadd.f32 %v691, 1.0
  %v704 = vadd.f32 %v693, 1.0
  %v705 = vadd.f32 %v695, 1.0
  %v706 = vadd.f32 %v697, 1.0
  %v707 = vadd.f32 %v699, 1.0
  %v708 = vrcp.pop %v700
  %v709 = vmul.f32 %v700, %v708
  %v710 = vsub.f32 1.0, %v709
  %v711 = vmul.f32 %v708, %v710
  %v712 = vadd.f32 %v708, %v711
  %vm713 = vweird.f32 %v700
  %vm714 = vweird.f32 %v708
  %vm715 = vmor %vm713, %vm714
  %v716 = vsel %vm715, %v708, %v712
  %v717 = vand.u32 2147483647, %v700
  %vm718 = vcmp.eq.f32.partialorder %v717, 8.507059e+37
  %v719 = vand.u32 %v700, 2147483648
  %v720 = vor.u32 1.1754944e-38, %v719
  %v721 = vsel %vm718, %v720, %v716
  %v722 = vmul.f32 1.0, %v721
  %v723 = vrcp.pop %v701
  %v724 = vmul.f32 %v701, %v723
  %v725 = vsub.f32 1.0, %v724
  %v726 = vmul.f32 %v723, %v725
  %v727 = vadd.f32 %v723, %v726
  %vm728 = vweird.f32 %v701
  %vm729 = vweird.f32 %v723
  %vm730 = vmor %vm728, %vm729
  %v731 = vsel %vm730, %v723, %v727
  %v732 = vand.u32 2147483647, %v701
  %vm733 = vcmp.eq.f32.partialorder %v732, 8.507059e+37
  %v734 = vand.u32 %v701, 2147483648
  %v735 = vor.u32 1.1754944e-38, %v734
  %v736 = vsel %vm733, %v735, %v731
  %v737 = vmul.f32 1.0, %v736
  %v738 = vrcp.pop %v702
  %v739 = vmul.f32 %v702, %v738
  %v740 = vsub.f32 1.0, %v739
  %v741 = vmul.f32 %v738, %v740
  %v742 = vadd.f32 %v738, %v741
  %vm743 = vweird.f32 %v702
  %vm744 = vweird.f32 %v738
  %vm745 = vmor %vm743, %vm744
  %v746 = vsel %vm745, %v738, %v742
  %v747 = vand.u32 2147483647, %v702
  %vm748 = vcmp.eq.f32.partialorder %v747, 8.507059e+37
  %v749 = vand.u32 %v702, 2147483648
  %v750 = vor.u32 1.1754944e-38, %v749
  %v751 = vsel %vm748, %v750, %v746
  %v752 = vmul.f32 1.0, %v751
  %v753 = vrcp.pop %v703
  %v754 = vmul.f32 %v703, %v753
  %v755 = vsub.f32 1.0, %v754
  %v756 = vmul.f32 %v753, %v755
  %v757 = vadd.f32 %v753, %v756
  %vm758 = vweird.f32 %v703
  %vm759 = vweird.f32 %v753
  %vm760 = vmor %vm758, %vm759
  %v761 = vsel %vm760, %v753, %v757
  %v762 = vand.u32 2147483647, %v703
  %vm763 = vcmp.eq.f32.partialorder %v762, 8.507059e+37
  %v764 = vand.u32 %v703, 2147483648
  %v765 = vor.u32 1.1754944e-38, %v764
  %v766 = vsel %vm763, %v765, %v761
  %v767 = vmul.f32 1.0, %v766
  %v768 = vrcp.pop %v704
  %v769 = vmul.f32 %v704, %v768
  %v770 = vsub.f32 1.0, %v769
  %v771 = vmul.f32 %v768, %v770
  %v772 = vadd.f32 %v768, %v771
  %vm773 = vweird.f32 %v704
  %vm774 = vweird.f32 %v768
  %vm775 = vmor %vm773, %vm774
  %v776 = vsel %vm775, %v768, %v772
  %v777 = vand.u32 2147483647, %v704
  %vm778 = vcmp.eq.f32.partialorder %v777, 8.507059e+37
  %v779 = vand.u32 %v704, 2147483648
  %v780 = vor.u32 1.1754944e-38, %v779
  %v781 = vsel %vm778, %v780, %v776
  %v782 = vmul.f32 1.0, %v781
  %v783 = vrcp.pop %v705
  %v784 = vmul.f32 %v705, %v783
  %v785 = vsub.f32 1.0, %v784
  %v786 = vmul.f32 %v783, %v785
  %v787 = vadd.f32 %v783, %v786
  %vm788 = vweird.f32 %v705
  %vm789 = vweird.f32 %v783
  %vm790 = vmor %vm788, %vm789
  %v791 = vsel %vm790, %v783, %v787
  %v792 = vand.u32 2147483647, %v705
  %vm793 = vcmp.eq.f32.partialorder %v792, 8.507059e+37
  %v794 = vand.u32 %v705, 2147483648
  %v795 = vor.u32 1.1754944e-38, %v794
  %v796 = vsel %vm793, %v795, %v791
  %v797 = vmul.f32 1.0, %v796
  %v798 = vrcp.pop %v706
  %v799 = vmul.f32 %v706, %v798
  %v800 = vsub.f32 1.0, %v799
  %v801 = vmul.f32 %v798, %v800
  %v802 = vadd.f32 %v798, %v801
  %vm803 = vweird.f32 %v706
  %vm804 = vweird.f32 %v798
  %vm805 = vmor %vm803, %vm804
  %v806 = vsel %vm805, %v798, %v802
  %v807 = vand.u32 2147483647, %v706
  %vm808 = vcmp.eq.f32.partialorder %v807, 8.507059e+37
  %v809 = vand.u32 %v706, 2147483648
  %v810 = vor.u32 1.1754944e-38, %v809
  %v811 = vsel %vm808, %v810, %v806
  %v812 = vmul.f32 1.0, %v811
  %v813 = vrcp.pop %v707
  %v814 = vmul.f32 %v707, %v813
  %v815 = vsub.f32 1.0, %v814
  %v816 = vmul.f32 %v813, %v815
  %v817 = vadd.f32 %v813, %v816
  %vm818 = vweird.f32 %v707
  %vm819 = vweird.f32 %v813
  %vm820 = vmor %vm818, %vm819
  %v821 = vsel %vm820, %v813, %v817
  %v822 = vand.u32 2147483647, %v707
  %vm823 = vcmp.eq.f32.partialorder %v822, 8.507059e+37
  %v824 = vand.u32 %v707, 2147483648
  %v825 = vor.u32 1.1754944e-38, %v824
  %v826 = vsel %vm823, %v825, %v821
  %v827 = vmul.f32 1.0, %v826
  %828 = vrot.lane.b32.xlu0 %v628, 48
  %v829 = vpop.permute.xlu0 %828
  %830 = vrot.lane.b32.xlu0 %v629, 48
  %v831 = vpop.permute.xlu0 %830
  %832 = vrot.lane.b32.xlu0 %v630, 48
  %v833 = vpop.permute.xlu0 %832
  %834 = vrot.lane.b32.xlu0 %v631, 48
  %v835 = vpop.permute.xlu0 %834
  %836 = vrot.lane.b32.xlu0 %v632, 48
  %v837 = vpop.permute.xlu0 %836
  %838 = vrot.lane.b32.xlu0 %v633, 48
  %v839 = vpop.permute.xlu0 %838
  %840 = vrot.lane.b32.xlu0 %v634, 48
  %v841 = vpop.permute.xlu0 %840
  %842 = vrot.lane.b32.xlu0 %v635, 48
  %v843 = vpop.permute.xlu0 %842
  %v852 = vmul.f32 %v722, %v829
  %v853 = vmul.f32 %v737, %v831
  %v854 = vmul.f32 %v752, %v833
  %v855 = vmul.f32 %v767, %v835
  %v856 = vmul.f32 %v782, %v837
  %v857 = vmul.f32 %v797, %v839
  %v858 = vmul.f32 %v812, %v841
  %v859 = vmul.f32 %v827, %v843
  %868 = vrot.lane.b32.xlu0 %v852, 32
  %v869 = vpop.permute.xlu0 %868
  %870 = vrot.lane.b32.xlu0 %v853, 32
  %v871 = vpop.permute.xlu0 %870
  %872 = vrot.lane.b32.xlu0 %v854, 32
  %v873 = vpop.permute.xlu0 %872
  %874 = vrot.lane.b32.xlu0 %v855, 32
  %v875 = vpop.permute.xlu0 %874
  %876 = vrot.lane.b32.xlu0 %v856, 32
  %v877 = vpop.permute.xlu0 %876
  %878 = vrot.lane.b32.xlu0 %v857, 32
  %v879 = vpop.permute.xlu0 %878
  %880 = vrot.lane.b32.xlu0 %v858, 32
  %v881 = vpop.permute.xlu0 %880
  %882 = vrot.lane.b32.xlu0 %v859, 32
  %v883 = vpop.permute.xlu0 %882
  %v892 = vadd.f32 %v614, %v869
  %v893 = vadd.f32 %v615, %v871
  %v894 = vadd.f32 %v616, %v873
  %v895 = vadd.f32 %v617, %v875
  %v896 = vadd.f32 %v618, %v877
  %v897 = vadd.f32 %v619, %v879
  %v898 = vadd.f32 %v620, %v881
  %v899 = vadd.f32 %v621, %v883
  %v900 = vtanh.pop %v892
  %v901 = vtanh.pop %v893
  %v902 = vtanh.pop %v894
  %v903 = vtanh.pop %v895
  %v904 = vtanh.pop %v896
  %v905 = vtanh.pop %v897
  %v906 = vtanh.pop %v898
  %v907 = vtanh.pop %v899
  %v908 = vsub.f32 1.0, %v722
  %v909 = vsub.f32 1.0, %v737
  %v910 = vsub.f32 1.0, %v752
  %v911 = vsub.f32 1.0, %v767
  %v912 = vsub.f32 1.0, %v782
  %v913 = vsub.f32 1.0, %v797
  %v914 = vsub.f32 1.0, %v812
  %v915 = vsub.f32 1.0, %v827
  %924 = vrot.lane.b32.xlu0 %v900, 112
  %v925 = vpop.permute.xlu0 %924
  %926 = vrot.lane.b32.xlu0 %v901, 112
  %v927 = vpop.permute.xlu0 %926
  %928 = vrot.lane.b32.xlu0 %v902, 112
  %v929 = vpop.permute.xlu0 %928
  %930 = vrot.lane.b32.xlu0 %v903, 112
  %v931 = vpop.permute.xlu0 %930
  %932 = vrot.lane.b32.xlu0 %v904, 112
  %v933 = vpop.permute.xlu0 %932
  %934 = vrot.lane.b32.xlu0 %v905, 112
  %v935 = vpop.permute.xlu0 %934
  %936 = vrot.lane.b32.xlu0 %v906, 112
  %v937 = vpop.permute.xlu0 %936
  %938 = vrot.lane.b32.xlu0 %v907, 112
  %v939 = vpop.permute.xlu0 %938
  %v948 = vmul.f32 %v908, %v925
  %v949 = vmul.f32 %v909, %v927
  %v950 = vmul.f32 %v910, %v929
  %v951 = vmul.f32 %v911, %v931
  %v952 = vmul.f32 %v912, %v933
  %v953 = vmul.f32 %v913, %v935
  %v954 = vmul.f32 %v914, %v937
  %v955 = vmul.f32 %v915, %v939
  %956 = vrot.lane.b32.xlu0 %v118, 16
  %v957 = vpop.permute.xlu0 %956
  %958 = vrot.lane.b32.xlu0 %v121, 16
  %v959 = vpop.permute.xlu0 %958
  %960 = vrot.lane.b32.xlu0 %v124, 16
  %v961 = vpop.permute.xlu0 %960
  %962 = vrot.lane.b32.xlu0 %v127, 16
  %v963 = vpop.permute.xlu0 %962
  %964 = vrot.lane.b32.xlu0 %v130, 16
  %v965 = vpop.permute.xlu0 %964
  %966 = vrot.lane.b32.xlu0 %v133, 16
  %v967 = vpop.permute.xlu0 %966
  %968 = vrot.lane.b32.xlu0 %v136, 16
  %v969 = vpop.permute.xlu0 %968
  %970 = vrot.lane.b32.xlu0 %v139, 16
  %v971 = vpop.permute.xlu0 %970
  %v980 = vmul.f32 %v722, %v957
  %v981 = vmul.f32 %v737, %v959
  %v982 = vmul.f32 %v752, %v961
  %v983 = vmul.f32 %v767, %v963
  %v984 = vmul.f32 %v782, %v965
  %v985 = vmul.f32 %v797, %v967
  %v986 = vmul.f32 %v812, %v969
  %v987 = vmul.f32 %v827, %v971
  %v988 = vadd.f32 %v948, %v980
  %v989 = vadd.f32 %v949, %v981
  %v990 = vadd.f32 %v950, %v982
  %v991 = vadd.f32 %v951, %v983
  %v992 = vadd.f32 %v952, %v984
  %v993 = vadd.f32 %v953, %v985
  %v994 = vadd.f32 %v954, %v986
  %v995 = vadd.f32 %v955, %v987
  %1004 = vrot.lane.b32.xlu0 %v988, 112
  %v1005 = vpop.permute.xlu0 %1004
  %1006 = vrot.lane.b32.xlu0 %v989, 112
  %v1007 = vpop.permute.xlu0 %1006
  %1008 = vrot.lane.b32.xlu0 %v990, 112
  %v1009 = vpop.permute.xlu0 %1008
  %1010 = vrot.lane.b32.xlu0 %v991, 112
  %v1011 = vpop.permute.xlu0 %1010
  %1012 = vrot.lane.b32.xlu0 %v992, 112
  %v1013 = vpop.permute.xlu0 %1012
  %1014 = vrot.lane.b32.xlu0 %v993, 112
  %v1015 = vpop.permute.xlu0 %1014
  %1016 = vrot.lane.b32.xlu0 %v994, 112
  %v1017 = vpop.permute.xlu0 %1016
  %1018 = vrot.lane.b32.xlu0 %v995, 112
  %v1019 = vpop.permute.xlu0 %1018
  %1028 = vmatpush.msra.mxu0 0.0
  %1029 = vmatpush.msra.mxu0 0.0
  %1030 = vmatpush.msra.mxu0 0.0
  %1031 = vmatpush.msra.mxu0 0.0
  %1032 = vmatpush.msra.mxu0 0.0
  %1033 = vmatpush.msra.mxu0 0.0
  %1034 = vmatpush.msra.mxu0 0.0
  %1035 = vmatpush.msra.mxu0 0.0
  %1036 = vmatpush.msra.mxu0 %v1019
  %1037 = vmatpush.msra.mxu0 %v1017
  %1038 = vmatpush.msra.mxu0 %v1015
  %1039 = vmatpush.msra.mxu0 %v1013
  %1040 = vmatpush.msra.mxu0 %v1011
  %1041 = vmatpush.msra.mxu0 %v1009
  %1042 = vmatpush.msra.mxu0 %v1007
  %1043 = vmatpush.msra.mxu0 %v1005
  %1044 = vmatmul.f32.gmra.mxu0 %v167
  %v1045 = vpop.f32.mrf.mxu0
  %v1046 = vadd.f32 0.0, %v1045
  %1047 = vmatmul.f32.gmra.mxu0 %v170
  %v1048 = vpop.f32.mrf.mxu0
  %v1049 = vadd.f32 0.0, %v1048
  %1050 = vmatmul.f32.gmra.mxu0 %v173
  %v1051 = vpop.f32.mrf.mxu0
  %v1052 = vadd.f32 0.0, %v1051
  %1053 = vmatmul.f32.gmra.mxu0 %v176
  %v1054 = vpop.f32.mrf.mxu0
  %v1055 = vadd.f32 0.0, %v1054
  %1056 = vmatmul.f32.gmra.mxu0 %v179
  %v1057 = vpop.f32.mrf.mxu0
  %v1058 = vadd.f32 0.0, %v1057
  %1059 = vmatmul.f32.gmra.mxu0 %v182
  %v1060 = vpop.f32.mrf.mxu0
  %v1061 = vadd.f32 0.0, %v1060
  %1062 = vmatmul.f32.gmra.mxu0 %v185
  %v1063 = vpop.f32.mrf.mxu0
  %v1064 = vadd.f32 0.0, %v1063
  %1065 = vmatmul.f32.gmra.mxu0 %v188
  %v1066 = vpop.f32.mrf.mxu0
  %v1067 = vadd.f32 0.0, %v1066
  %1068 = vmatmul.f32.gmra.mxu0 %v191
  %v1069 = vpop.f32.mrf.mxu0
  %v1070 = vadd.f32 0.0, %v1069
  %1071 = vmatmul.f32.gmra.mxu0 %v194
  %v1072 = vpop.f32.mrf.mxu0
  %v1073 = vadd.f32 0.0, %v1072
  %1074 = vmatmul.f32.gmra.mxu0 %v197
  %v1075 = vpop.f32.mrf.mxu0
  %v1076 = vadd.f32 0.0, %v1075
  %1077 = vmatmul.f32.gmra.mxu0 %v200
  %v1078 = vpop.f32.mrf.mxu0
  %v1079 = vadd.f32 0.0, %v1078
  %1080 = vmatmul.f32.gmra.mxu0 %v203
  %v1081 = vpop.f32.mrf.mxu0
  %v1082 = vadd.f32 0.0, %v1081
  %1083 = vmatmul.f32.gmra.mxu0 %v206
  %v1084 = vpop.f32.mrf.mxu0
  %v1085 = vadd.f32 0.0, %v1084
  %1086 = vmatmul.f32.gmra.mxu0 %v209
  %v1087 = vpop.f32.mrf.mxu0
  %v1088 = vadd.f32 0.0, %v1087
  %1089 = vmatmul.f32.gmra.mxu0 %v212
  %v1090 = vpop.f32.mrf.mxu0
  %v1091 = vadd.f32 0.0, %v1090
  %1092 = vdwg.mxu0
  %v1093 = vmul.f32 %v282, %v988
  %v1094 = vmul.f32 %v287, %v989
  %v1095 = vmul.f32 %v292, %v990
  %v1096 = vmul.f32 %v297, %v991
  %v1097 = vmul.f32 %v302, %v992
  %v1098 = vmul.f32 %v307, %v993
  %v1099 = vmul.f32 %v312, %v994
  %v1100 = vmul.f32 %v317, %v995
  %v1101 = vmul.f32 %v329, %v988
  %v1102 = vmul.f32 %v333, %v989
  %v1103 = vmul.f32 %v337, %v990
  %v1104 = vmul.f32 %v341, %v991
  %v1105 = vmul.f32 %v345, %v992
  %v1106 = vmul.f32 %v349, %v993
  %v1107 = vmul.f32 %v353, %v994
  %v1108 = vmul.f32 %v357, %v995
  %1117 = vrot.lane.b32.xlu0 %v1070, 16
  %v1118 = vpop.permute.xlu0 %1117
  %1119 = vrot.lane.b32.xlu0 %v1073, 16
  %v1120 = vpop.permute.xlu0 %1119
  %1121 = vrot.lane.b32.xlu0 %v1076, 16
  %v1122 = vpop.permute.xlu0 %1121
  %1123 = vrot.lane.b32.xlu0 %v1079, 16
  %v1124 = vpop.permute.xlu0 %1123
  %1125 = vrot.lane.b32.xlu0 %v1082, 16
  %v1126 = vpop.permute.xlu0 %1125
  %1127 = vrot.lane.b32.xlu0 %v1085, 16
  %v1128 = vpop.permute.xlu0 %1127
  %1129 = vrot.lane.b32.xlu0 %v1088, 16
  %v1130 = vpop.permute.xlu0 %1129
  %1131 = vrot.lane.b32.xlu0 %v1091, 16
  %v1132 = vpop.permute.xlu0 %1131
  %1149 = vrot.lane.b32.xlu0 %v1093, 16
  %v1150 = vpop.permute.xlu0 %1149
  %1151 = vrot.lane.b32.xlu0 %v1094, 16
  %v1152 = vpop.permute.xlu0 %1151
  %1153 = vrot.lane.b32.xlu0 %v1095, 16
  %v1154 = vpop.permute.xlu0 %1153
  %1155 = vrot.lane.b32.xlu0 %v1096, 16
  %v1156 = vpop.permute.xlu0 %1155
  %1157 = vrot.lane.b32.xlu0 %v1097, 16
  %v1158 = vpop.permute.xlu0 %1157
  %1159 = vrot.lane.b32.xlu0 %v1098, 16
  %v1160 = vpop.permute.xlu0 %1159
  %1161 = vrot.lane.b32.xlu0 %v1099, 16
  %v1162 = vpop.permute.xlu0 %1161
  %1163 = vrot.lane.b32.xlu0 %v1100, 16
  %v1164 = vpop.permute.xlu0 %1163
  %1181 = vrot.lane.b32.xlu0 %v1101, 32
  %v1182 = vpop.permute.xlu0 %1181
  %1183 = vrot.lane.b32.xlu0 %v1102, 32
  %v1184 = vpop.permute.xlu0 %1183
  %1185 = vrot.lane.b32.xlu0 %v1103, 32
  %v1186 = vpop.permute.xlu0 %1185
  %1187 = vrot.lane.b32.xlu0 %v1104, 32
  %v1188 = vpop.permute.xlu0 %1187
  %1189 = vrot.lane.b32.xlu0 %v1105, 32
  %v1190 = vpop.permute.xlu0 %1189
  %1191 = vrot.lane.b32.xlu0 %v1106, 32
  %v1192 = vpop.permute.xlu0 %1191
  %1193 = vrot.lane.b32.xlu0 %v1107, 32
  %v1194 = vpop.permute.xlu0 %1193
  %1195 = vrot.lane.b32.xlu0 %v1108, 32
  %v1196 = vpop.permute.xlu0 %1195
  %1205 = vrot.lane.b32.xlu0 %v988, 48
  %v1206 = vpop.permute.xlu0 %1205
  %1207 = vrot.lane.b32.xlu0 %v989, 48
  %v1208 = vpop.permute.xlu0 %1207
  %1209 = vrot.lane.b32.xlu0 %v990, 48
  %v1210 = vpop.permute.xlu0 %1209
  %1211 = vrot.lane.b32.xlu0 %v991, 48
  %v1212 = vpop.permute.xlu0 %1211
  %1213 = vrot.lane.b32.xlu0 %v992, 48
  %v1214 = vpop.permute.xlu0 %1213
  %1215 = vrot.lane.b32.xlu0 %v993, 48
  %v1216 = vpop.permute.xlu0 %1215
  %1217 = vrot.lane.b32.xlu0 %v994, 48
  %v1218 = vpop.permute.xlu0 %1217
  %1219 = vrot.lane.b32.xlu0 %v995, 48
  %v1220 = vpop.permute.xlu0 %1219
  %v1229 = vsel %vm495, %v1046, %v1118
  %v1230 = vsel %vm495, %v1049, %v1120
  %v1231 = vsel %vm495, %v1052, %v1122
  %v1232 = vsel %vm495, %v1055, %v1124
  %v1233 = vsel %vm495, %v1058, %v1126
  %v1234 = vsel %vm495, %v1061, %v1128
  %v1235 = vsel %vm495, %v1064, %v1130
  %v1236 = vsel %vm495, %v1067, %v1132
  %v1237 = vsel %vm504, %v1229, %v1150
  %v1238 = vsel %vm504, %v1230, %v1152
  %v1239 = vsel %vm504, %v1231, %v1154
  %v1240 = vsel %vm504, %v1232, %v1156
  %v1241 = vsel %vm504, %v1233, %v1158
  %v1242 = vsel %vm504, %v1234, %v1160
  %v1243 = vsel %vm504, %v1235, %v1162
  %v1244 = vsel %vm504, %v1236, %v1164
  %v1245 = vsel %vm513, %v1237, %v1182
  %v1246 = vsel %vm513, %v1238, %v1184
  %v1247 = vsel %vm513, %v1239, %v1186
  %v1248 = vsel %vm513, %v1240, %v1188
  %v1249 = vsel %vm513, %v1241, %v1190
  %v1250 = vsel %vm513, %v1242, %v1192
  %v1251 = vsel %vm513, %v1243, %v1194
  %v1252 = vsel %vm513, %v1244, %v1196
  %v1253 = vsel %vm165, %v1245, %v1206
  %v1254 = vsel %vm165, %v1246, %v1208
  %v1255 = vsel %vm165, %v1247, %v1210
  %v1256 = vsel %vm165, %v1248, %v1212
  %v1257 = vsel %vm165, %v1249, %v1214
  %v1258 = vsel %vm165, %v1250, %v1216
  %v1259 = vsel %vm165, %v1251, %v1218
  %v1260 = vsel %vm165, %v1252, %v1220
  %s1261 = scalar_lea.vmem %s9, 80
  %v1262 = vld [vmem:[%s1261] sm:$0xff]
  %v1263 = vld [vmem:[%s1261 + $0x8] sm:$0xff]
  %v1264 = vld [vmem:[%s1261 + $0x10] sm:$0xff]
  %v1265 = vld [vmem:[%s1261 + $0x18] sm:$0xff]
  %v1266 = vld [vmem:[%s1261 + $0x20] sm:$0xff]
  %v1267 = vld [vmem:[%s1261 + $0x28] sm:$0xff]
  %v1268 = vld [vmem:[%s1261 + $0x30] sm:$0xff]
  %v1269 = vld [vmem:[%s1261 + $0x38] sm:$0xff]
  %v1270 = vld [vmem:[%s1261 + $0x40] sm:$0xff]
  %v1271 = vld [vmem:[%s1261 + $0x48] sm:$0xff]
  %v1273 = vsel %vm540, %v1253, 0
  %v1276 = vsel %vm540, %v1254, 0
  %v1279 = vsel %vm540, %v1255, 0
  %v1282 = vsel %vm540, %v1256, 0
  %v1285 = vsel %vm540, %v1257, 0
  %v1288 = vsel %vm540, %v1258, 0
  %v1291 = vsel %vm540, %v1259, 0
  %v1294 = vsel %vm540, %v1260, 0
  %1296 = vmatpush.msra.mxu0 0.0
  %1297 = vmatpush.msra.mxu0 0.0
  %1298 = vmatpush.msra.mxu0 0.0
  %1299 = vmatpush.msra.mxu0 0.0
  %1300 = vmatpush.msra.mxu0 0.0
  %1301 = vmatpush.msra.mxu0 0.0
  %1302 = vmatpush.msra.mxu0 %v1271
  %1303 = vmatpush.msra.mxu0 %v1270
  %1304 = vmatpush.msra.mxu0 %v1269
  %1305 = vmatpush.msra.mxu0 %v1268
  %1306 = vmatpush.msra.mxu0 %v1267
  %1307 = vmatpush.msra.mxu0 %v1266
  %1308 = vmatpush.msra.mxu0 %v1265
  %1309 = vmatpush.msra.mxu0 %v1264
  %1310 = vmatpush.msra.mxu0 %v1263
  %1311 = vmatpush.msra.mxu0 %v1262
  %1312 = vmatmul.f32.gmra.mxu0 %v1273
  %v1313 = vpop.f32.mrf.mxu0
  %v1314 = vadd.f32 0.0, %v1313
  %1315 = vmatmul.f32.gmra.mxu0 %v1276
  %v1316 = vpop.f32.mrf.mxu0
  %v1317 = vadd.f32 0.0, %v1316
  %1318 = vmatmul.f32.gmra.mxu0 %v1279
  %v1319 = vpop.f32.mrf.mxu0
  %v1320 = vadd.f32 0.0, %v1319
  %1321 = vmatmul.f32.gmra.mxu0 %v1282
  %v1322 = vpop.f32.mrf.mxu0
  %v1323 = vadd.f32 0.0, %v1322
  %1324 = vmatmul.f32.gmra.mxu0 %v1285
  %v1325 = vpop.f32.mrf.mxu0
  %v1326 = vadd.f32 0.0, %v1325
  %1327 = vmatmul.f32.gmra.mxu0 %v1288
  %v1328 = vpop.f32.mrf.mxu0
  %v1329 = vadd.f32 0.0, %v1328
  %1330 = vmatmul.f32.gmra.mxu0 %v1291
  %v1331 = vpop.f32.mrf.mxu0
  %v1332 = vadd.f32 0.0, %v1331
  %1333 = vmatmul.f32.gmra.mxu0 %v1294
  %v1334 = vpop.f32.mrf.mxu0
  %v1335 = vadd.f32 0.0, %v1334
  %1336 = vdwg.mxu0
  %s1337 = scalar_lea.vmem %s10, 64
  %v1338 = vld [vmem:[%s1337] sm:$0xff]
  %v1339 = vld [vmem:[%s1337 + $0x8] sm:$0xff]
  %v1340 = vld [vmem:[%s1337 + $0x10] sm:$0xff]
  %v1341 = vld [vmem:[%s1337 + $0x18] sm:$0xff]
  %v1342 = vld [vmem:[%s1337 + $0x20] sm:$0xff]
  %v1343 = vld [vmem:[%s1337 + $0x28] sm:$0xff]
  %v1344 = vld [vmem:[%s1337 + $0x30] sm:$0xff]
  %v1345 = vld [vmem:[%s1337 + $0x38] sm:$0xff]
  %v1346 = vadd.f32 %v1314, %v1338
  %v1347 = vadd.f32 %v1317, %v1339
  %v1348 = vadd.f32 %v1320, %v1340
  %v1349 = vadd.f32 %v1323, %v1341
  %v1350 = vadd.f32 %v1326, %v1342
  %v1351 = vadd.f32 %v1329, %v1343
  %v1352 = vadd.f32 %v1332, %v1344
  %v1353 = vadd.f32 %v1335, %v1345
  %s1354 = scalar_lea.vmem %s11, 1
  %v1355 = vld [vmem:[%s1354] sm:$0x1]
  %v1357 = vperm.slane %v1355, 0
  %1358 = vrot.lane.b32.xlu0 %v1357, 48
  %v1359 = vpop.permute.xlu0 %1358
  %v1361 = vadd.f32 %v1314, %v1359
  %v1362 = vadd.f32 %v1317, %v1359
  %v1363 = vadd.f32 %v1320, %v1359
  %v1364 = vadd.f32 %v1323, %v1359
  %v1365 = vadd.f32 %v1326, %v1359
  %v1366 = vadd.f32 %v1329, %v1359
  %v1367 = vadd.f32 %v1332, %v1359
  %v1368 = vadd.f32 %v1335, %v1359
  %1377 = vrot.lane.b32.xlu0 %v1361, 80
  %v1378 = vpop.permute.xlu0 %1377
  %1379 = vrot.lane.b32.xlu0 %v1362, 80
  %v1380 = vpop.permute.xlu0 %1379
  %1381 = vrot.lane.b32.xlu0 %v1363, 80
  %v1382 = vpop.permute.xlu0 %1381
  %1383 = vrot.lane.b32.xlu0 %v1364, 80
  %v1384 = vpop.permute.xlu0 %1383
  %1385 = vrot.lane.b32.xlu0 %v1365, 80
  %v1386 = vpop.permute.xlu0 %1385
  %1387 = vrot.lane.b32.xlu0 %v1366, 80
  %v1388 = vpop.permute.xlu0 %1387
  %1389 = vrot.lane.b32.xlu0 %v1367, 80
  %v1390 = vpop.permute.xlu0 %1389
  %1391 = vrot.lane.b32.xlu0 %v1368, 80
  %v1392 = vpop.permute.xlu0 %1391
  %v1401 = vadd.f32 %v1346, %v1378
  %v1402 = vadd.f32 %v1347, %v1380
  %v1403 = vadd.f32 %v1348, %v1382
  %v1404 = vadd.f32 %v1349, %v1384
  %v1405 = vadd.f32 %v1350, %v1386
  %v1406 = vadd.f32 %v1351, %v1388
  %v1407 = vadd.f32 %v1352, %v1390
  %v1408 = vadd.f32 %v1353, %v1392
  %v1409 = vxor.u32 %v1401, 2147483648
  %v1410 = vxor.u32 %v1402, 2147483648
  %v1411 = vxor.u32 %v1403, 2147483648
  %v1412 = vxor.u32 %v1404, 2147483648
  %v1413 = vxor.u32 %v1405, 2147483648
  %v1414 = vxor.u32 %v1406, 2147483648
  %v1415 = vxor.u32 %v1407, 2147483648
  %v1416 = vxor.u32 %v1408, 2147483648
  %v1417 = vmul.f32 %v1409, 1.442695
  %v1418 = vpow.pop %v1417
  %v1419 = vmul.f32 %v1410, 1.442695
  %v1420 = vpow.pop %v1419
  %v1421 = vmul.f32 %v1411, 1.442695
  %v1422 = vpow.pop %v1421
  %v1423 = vmul.f32 %v1412, 1.442695
  %v1424 = vpow.pop %v1423
  %v1425 = vmul.f32 %v1413, 1.442695
  %v1426 = vpow.pop %v1425
  %v1427 = vmul.f32 %v1414, 1.442695
  %v1428 = vpow.pop %v1427
  %v1429 = vmul.f32 %v1415, 1.442695
  %v1430 = vpow.pop %v1429
  %v1431 = vmul.f32 %v1416, 1.442695
  %v1432 = vpow.pop %v1431
  %v1433 = vadd.f32 %v1418, 1.0
  %v1434 = vadd.f32 %v1420, 1.0
  %v1435 = vadd.f32 %v1422, 1.0
  %v1436 = vadd.f32 %v1424, 1.0
  %v1437 = vadd.f32 %v1426, 1.0
  %v1438 = vadd.f32 %v1428, 1.0
  %v1439 = vadd.f32 %v1430, 1.0
  %v1440 = vadd.f32 %v1432, 1.0
  %v1441 = vrcp.pop %v1433
  %v1442 = vmul.f32 %v1433, %v1441
  %v1443 = vsub.f32 1.0, %v1442
  %v1444 = vmul.f32 %v1441, %v1443
  %v1445 = vadd.f32 %v1441, %v1444
  %vm1446 = vweird.f32 %v1433
  %vm1447 = vweird.f32 %v1441
  %vm1448 = vmor %vm1446, %vm1447
  %v1449 = vsel %vm1448, %v1441, %v1445
  %v1450 = vand.u32 2147483647, %v1433
  %vm1451 = vcmp.eq.f32.partialorder %v1450, 8.507059e+37
  %v1452 = vand.u32 %v1433, 2147483648
  %v1453 = vor.u32 1.1754944e-38, %v1452
  %v1454 = vsel %vm1451, %v1453, %v1449
  %v1455 = vmul.f32 1.0, %v1454
  %v1456 = vrcp.pop %v1434
  %v1457 = vmul.f32 %v1434, %v1456
  %v1458 = vsub.f32 1.0, %v1457
  %v1459 = vmul.f32 %v1456, %v1458
  %v1460 = vadd.f32 %v1456, %v1459
  %vm1461 = vweird.f32 %v1434
  %vm1462 = vweird.f32 %v1456
  %vm1463 = vmor %vm1461, %vm1462
  %v1464 = vsel %vm1463, %v1456, %v1460
  %v1465 = vand.u32 2147483647, %v1434
  %vm1466 = vcmp.eq.f32.partialorder %v1465, 8.507059e+37
  %v1467 = vand.u32 %v1434, 2147483648
  %v1468 = vor.u32 1.1754944e-38, %v1467
  %v1469 = vsel %vm1466, %v1468, %v1464
  %v1470 = vmul.f32 1.0, %v1469
  %v1471 = vrcp.pop %v1435
  %v1472 = vmul.f32 %v1435, %v1471
  %v1473 = vsub.f32 1.0, %v1472
  %v1474 = vmul.f32 %v1471, %v1473
  %v1475 = vadd.f32 %v1471, %v1474
  %vm1476 = vweird.f32 %v1435
  %vm1477 = vweird.f32 %v1471
  %vm1478 = vmor %vm1476, %vm1477
  %v1479 = vsel %vm1478, %v1471, %v1475
  %v1480 = vand.u32 2147483647, %v1435
  %vm1481 = vcmp.eq.f32.partialorder %v1480, 8.507059e+37
  %v1482 = vand.u32 %v1435, 2147483648
  %v1483 = vor.u32 1.1754944e-38, %v1482
  %v1484 = vsel %vm1481, %v1483, %v1479
  %v1485 = vmul.f32 1.0, %v1484
  %v1486 = vrcp.pop %v1436
  %v1487 = vmul.f32 %v1436, %v1486
  %v1488 = vsub.f32 1.0, %v1487
  %v1489 = vmul.f32 %v1486, %v1488
  %v1490 = vadd.f32 %v1486, %v1489
  %vm1491 = vweird.f32 %v1436
  %vm1492 = vweird.f32 %v1486
  %vm1493 = vmor %vm1491, %vm1492
  %v1494 = vsel %vm1493, %v1486, %v1490
  %v1495 = vand.u32 2147483647, %v1436
  %vm1496 = vcmp.eq.f32.partialorder %v1495, 8.507059e+37
  %v1497 = vand.u32 %v1436, 2147483648
  %v1498 = vor.u32 1.1754944e-38, %v1497
  %v1499 = vsel %vm1496, %v1498, %v1494
  %v1500 = vmul.f32 1.0, %v1499
  %v1501 = vrcp.pop %v1437
  %v1502 = vmul.f32 %v1437, %v1501
  %v1503 = vsub.f32 1.0, %v1502
  %v1504 = vmul.f32 %v1501, %v1503
  %v1505 = vadd.f32 %v1501, %v1504
  %vm1506 = vweird.f32 %v1437
  %vm1507 = vweird.f32 %v1501
  %vm1508 = vmor %vm1506, %vm1507
  %v1509 = vsel %vm1508, %v1501, %v1505
  %v1510 = vand.u32 2147483647, %v1437
  %vm1511 = vcmp.eq.f32.partialorder %v1510, 8.507059e+37
  %v1512 = vand.u32 %v1437, 2147483648
  %v1513 = vor.u32 1.1754944e-38, %v1512
  %v1514 = vsel %vm1511, %v1513, %v1509
  %v1515 = vmul.f32 1.0, %v1514
  %v1516 = vrcp.pop %v1438
  %v1517 = vmul.f32 %v1438, %v1516
  %v1518 = vsub.f32 1.0, %v1517
  %v1519 = vmul.f32 %v1516, %v1518
  %v1520 = vadd.f32 %v1516, %v1519
  %vm1521 = vweird.f32 %v1438
  %vm1522 = vweird.f32 %v1516
  %vm1523 = vmor %vm1521, %vm1522
  %v1524 = vsel %vm1523, %v1516, %v1520
  %v1525 = vand.u32 2147483647, %v1438
  %vm1526 = vcmp.eq.f32.partialorder %v1525, 8.507059e+37
  %v1527 = vand.u32 %v1438, 2147483648
  %v1528 = vor.u32 1.1754944e-38, %v1527
  %v1529 = vsel %vm1526, %v1528, %v1524
  %v1530 = vmul.f32 1.0, %v1529
  %v1531 = vrcp.pop %v1439
  %v1532 = vmul.f32 %v1439, %v1531
  %v1533 = vsub.f32 1.0, %v1532
  %v1534 = vmul.f32 %v1531, %v1533
  %v1535 = vadd.f32 %v1531, %v1534
  %vm1536 = vweird.f32 %v1439
  %vm1537 = vweird.f32 %v1531
  %vm1538 = vmor %vm1536, %vm1537
  %v1539 = vsel %vm1538, %v1531, %v1535
  %v1540 = vand.u32 2147483647, %v1439
  %vm1541 = vcmp.eq.f32.partialorder %v1540, 8.507059e+37
  %v1542 = vand.u32 %v1439, 2147483648
  %v1543 = vor.u32 1.1754944e-38, %v1542
  %v1544 = vsel %vm1541, %v1543, %v1539
  %v1545 = vmul.f32 1.0, %v1544
  %v1546 = vrcp.pop %v1440
  %v1547 = vmul.f32 %v1440, %v1546
  %v1548 = vsub.f32 1.0, %v1547
  %v1549 = vmul.f32 %v1546, %v1548
  %v1550 = vadd.f32 %v1546, %v1549
  %vm1551 = vweird.f32 %v1440
  %vm1552 = vweird.f32 %v1546
  %vm1553 = vmor %vm1551, %vm1552
  %v1554 = vsel %vm1553, %v1546, %v1550
  %v1555 = vand.u32 2147483647, %v1440
  %vm1556 = vcmp.eq.f32.partialorder %v1555, 8.507059e+37
  %v1557 = vand.u32 %v1440, 2147483648
  %v1558 = vor.u32 1.1754944e-38, %v1557
  %v1559 = vsel %vm1556, %v1558, %v1554
  %v1560 = vmul.f32 1.0, %v1559
  %1561 = vrot.lane.b32.xlu0 %v1361, 48
  %v1562 = vpop.permute.xlu0 %1561
  %1563 = vrot.lane.b32.xlu0 %v1362, 48
  %v1564 = vpop.permute.xlu0 %1563
  %1565 = vrot.lane.b32.xlu0 %v1363, 48
  %v1566 = vpop.permute.xlu0 %1565
  %1567 = vrot.lane.b32.xlu0 %v1364, 48
  %v1568 = vpop.permute.xlu0 %1567
  %1569 = vrot.lane.b32.xlu0 %v1365, 48
  %v1570 = vpop.permute.xlu0 %1569
  %1571 = vrot.lane.b32.xlu0 %v1366, 48
  %v1572 = vpop.permute.xlu0 %1571
  %1573 = vrot.lane.b32.xlu0 %v1367, 48
  %v1574 = vpop.permute.xlu0 %1573
  %1575 = vrot.lane.b32.xlu0 %v1368, 48
  %v1576 = vpop.permute.xlu0 %1575
  %v1585 = vmul.f32 %v1455, %v1562
  %v1586 = vmul.f32 %v1470, %v1564
  %v1587 = vmul.f32 %v1485, %v1566
  %v1588 = vmul.f32 %v1500, %v1568
  %v1589 = vmul.f32 %v1515, %v1570
  %v1590 = vmul.f32 %v1530, %v1572
  %v1591 = vmul.f32 %v1545, %v1574
  %v1592 = vmul.f32 %v1560, %v1576
  %1601 = vrot.lane.b32.xlu0 %v1585, 32
  %v1602 = vpop.permute.xlu0 %1601
  %1603 = vrot.lane.b32.xlu0 %v1586, 32
  %v1604 = vpop.permute.xlu0 %1603
  %1605 = vrot.lane.b32.xlu0 %v1587, 32
  %v1606 = vpop.permute.xlu0 %1605
  %1607 = vrot.lane.b32.xlu0 %v1588, 32
  %v1608 = vpop.permute.xlu0 %1607
  %1609 = vrot.lane.b32.xlu0 %v1589, 32
  %v1610 = vpop.permute.xlu0 %1609
  %1611 = vrot.lane.b32.xlu0 %v1590, 32
  %v1612 = vpop.permute.xlu0 %1611
  %1613 = vrot.lane.b32.xlu0 %v1591, 32
  %v1614 = vpop.permute.xlu0 %1613
  %1615 = vrot.lane.b32.xlu0 %v1592, 32
  %v1616 = vpop.permute.xlu0 %1615
  %v1625 = vadd.f32 %v1346, %v1602
  %v1626 = vadd.f32 %v1347, %v1604
  %v1627 = vadd.f32 %v1348, %v1606
  %v1628 = vadd.f32 %v1349, %v1608
  %v1629 = vadd.f32 %v1350, %v1610
  %v1630 = vadd.f32 %v1351, %v1612
  %v1631 = vadd.f32 %v1352, %v1614
  %v1632 = vadd.f32 %v1353, %v1616
  %v1633 = vtanh.pop %v1625
  %v1634 = vtanh.pop %v1626
  %v1635 = vtanh.pop %v1627
  %v1636 = vtanh.pop %v1628
  %v1637 = vtanh.pop %v1629
  %v1638 = vtanh.pop %v1630
  %v1639 = vtanh.pop %v1631
  %v1640 = vtanh.pop %v1632
  %v1641 = vsub.f32 1.0, %v1455
  %v1642 = vsub.f32 1.0, %v1470
  %v1643 = vsub.f32 1.0, %v1485
  %v1644 = vsub.f32 1.0, %v1500
  %v1645 = vsub.f32 1.0, %v1515
  %v1646 = vsub.f32 1.0, %v1530
  %v1647 = vsub.f32 1.0, %v1545
  %v1648 = vsub.f32 1.0, %v1560
  %1657 = vrot.lane.b32.xlu0 %v1633, 112
  %v1658 = vpop.permute.xlu0 %1657
  %1659 = vrot.lane.b32.xlu0 %v1634, 112
  %v1660 = vpop.permute.xlu0 %1659
  %1661 = vrot.lane.b32.xlu0 %v1635, 112
  %v1662 = vpop.permute.xlu0 %1661
  %1663 = vrot.lane.b32.xlu0 %v1636, 112
  %v1664 = vpop.permute.xlu0 %1663
  %1665 = vrot.lane.b32.xlu0 %v1637, 112
  %v1666 = vpop.permute.xlu0 %1665
  %1667 = vrot.lane.b32.xlu0 %v1638, 112
  %v1668 = vpop.permute.xlu0 %1667
  %1669 = vrot.lane.b32.xlu0 %v1639, 112
  %v1670 = vpop.permute.xlu0 %1669
  %1671 = vrot.lane.b32.xlu0 %v1640, 112
  %v1672 = vpop.permute.xlu0 %1671
  %v1681 = vmul.f32 %v1641, %v1658
  %v1682 = vmul.f32 %v1642, %v1660
  %v1683 = vmul.f32 %v1643, %v1662
  %v1684 = vmul.f32 %v1644, %v1664
  %v1685 = vmul.f32 %v1645, %v1666
  %v1686 = vmul.f32 %v1646, %v1668
  %v1687 = vmul.f32 %v1647, %v1670
  %v1688 = vmul.f32 %v1648, %v1672
  %v1689 = vmul.f32 %v1455, %v988
  %v1690 = vmul.f32 %v1470, %v989
  %v1691 = vmul.f32 %v1485, %v990
  %v1692 = vmul.f32 %v1500, %v991
  %v1693 = vmul.f32 %v1515, %v992
  %v1694 = vmul.f32 %v1530, %v993
  %v1695 = vmul.f32 %v1545, %v994
  %v1696 = vmul.f32 %v1560, %v995
  %v1697 = vadd.f32 %v1681, %v1689
  %v1698 = vadd.f32 %v1682, %v1690
  %v1699 = vadd.f32 %v1683, %v1691
  %v1700 = vadd.f32 %v1684, %v1692
  %v1701 = vadd.f32 %v1685, %v1693
  %v1702 = vadd.f32 %v1686, %v1694
  %v1703 = vadd.f32 %v1687, %v1695
  %v1704 = vadd.f32 %v1688, %v1696
  %v1705 = vld [vmem:[%s5] sm:$0x3]
  %v1706 = vld [vmem:[%s7] sm:$0x1f]
  %v1707 = vld [vmem:[%s8] sm:$0x1]
  %v1709 = vperm.slane %v1707, 0
  %vm1711 = vcmask 39936
  %v1713 = vsel %vm1711, %v1705, 0
  %vm1715 = vcmask 1044480
  %v1717 = vsel %vm1715, %v1706, 0
  %1719 = vmatpush.msra.mxu0 0.0
  %1720 = vmatpush.msra.mxu0 0.0
  %1721 = vmatpush.msra.mxu0 0.0
  %1722 = vmatpush.msra.mxu0 0.0
  %1723 = vmatpush.msra.mxu0 0.0
  %1724 = vmatpush.msra.mxu0 0.0
  %1725 = vmatpush.msra.mxu0 0.0
  %1726 = vmatpush.msra.mxu0 0.0
  %1727 = vmatpush.msra.mxu0 0.0
  %1728 = vmatpush.msra.mxu0 0.0
  %1729 = vmatpush.msra.mxu0 0.0
  %1730 = vmatpush.msra.mxu0 0.0
  %1731 = vmatpush.msra.mxu0 0.0
  %1732 = vmatpush.msra.mxu0 0.0
  %1733 = vmatpush.msra.mxu0 0.0
  %1734 = vmatpush.msra.mxu0 %v1717
  %1735 = vmatmul.f32.gmra.mxu0 %v1713
  %v1736 = vpop.f32.mrf.mxu0
  %v1737 = vadd.f32 %v1709, %v1736
  %1738 = vdwg.mxu0
  %v1739 = vmax.f32 %v1737, 0.0
  %v1740 = vld [vmem:[%s4] sm:$0xff]
  %v1741 = vld [vmem:[%s4 + $0x8] sm:$0xff]
  %v1742 = vld [vmem:[%s4 + $0x10] sm:$0xff]
  %v1743 = vld [vmem:[%s4 + $0x18] sm:$0xff]
  %v1744 = vld [vmem:[%s4 + $0x20] sm:$0xff]
  %v1745 = vld [vmem:[%s4 + $0x28] sm:$0xff]
  %v1746 = vld [vmem:[%s4 + $0x30] sm:$0xff]
  %v1747 = vld [vmem:[%s4 + $0x38] sm:$0xff]
  %vm1748 = vcmask 15360
  %v1750 = vsel %vm1748, %v1740, 0
  %v1753 = vsel %vm1748, %v1741, 0
  %v1756 = vsel %vm1748, %v1742, 0
  %v1759 = vsel %vm1748, %v1743, 0
  %v1762 = vsel %vm1748, %v1744, 0
  %v1765 = vsel %vm1748, %v1745, 0
  %v1768 = vsel %vm1748, %v1746, 0
  %v1771 = vsel %vm1748, %v1747, 0
  %vm1773 = vcmask 1041408
  %v1775 = vsel %vm1773, %v1739, 0
  %1777 = vmatpush.msra.mxu0 0.0
  %1778 = vmatpush.msra.mxu0 0.0
  %1779 = vmatpush.msra.mxu0 0.0
  %1780 = vmatpush.msra.mxu0 0.0
  %1781 = vmatpush.msra.mxu0 0.0
  %1782 = vmatpush.msra.mxu0 0.0
  %1783 = vmatpush.msra.mxu0 0.0
  %1784 = vmatpush.msra.mxu0 0.0
  %1785 = vmatpush.msra.mxu0 0.0
  %1786 = vmatpush.msra.mxu0 0.0
  %1787 = vmatpush.msra.mxu0 0.0
  %1788 = vmatpush.msra.mxu0 0.0
  %1789 = vmatpush.msra.mxu0 0.0
  %1790 = vmatpush.msra.mxu0 0.0
  %1791 = vmatpush.msra.mxu0 0.0
  %1792 = vmatpush.msra.mxu0 %v1775
  %1793 = vmatmul.f32.gmra.mxu0 %v1750
  %v1794 = vpop.f32.mrf.mxu0
  %v1795 = vadd.f32 0.0, %v1794
  %1796 = vmatmul.f32.gmra.mxu0 %v1753
  %v1797 = vpop.f32.mrf.mxu0
  %v1798 = vadd.f32 0.0, %v1797
  %1799 = vmatmul.f32.gmra.mxu0 %v1756
  %v1800 = vpop.f32.mrf.mxu0
  %v1801 = vadd.f32 0.0, %v1800
  %1802 = vmatmul.f32.gmra.mxu0 %v1759
  %v1803 = vpop.f32.mrf.mxu0
  %v1804 = vadd.f32 0.0, %v1803
  %1805 = vmatmul.f32.gmra.mxu0 %v1762
  %v1806 = vpop.f32.mrf.mxu0
  %v1807 = vadd.f32 0.0, %v1806
  %1808 = vmatmul.f32.gmra.mxu0 %v1765
  %v1809 = vpop.f32.mrf.mxu0
  %v1810 = vadd.f32 0.0, %v1809
  %1811 = vmatmul.f32.gmra.mxu0 %v1768
  %v1812 = vpop.f32.mrf.mxu0
  %v1813 = vadd.f32 0.0, %v1812
  %1814 = vmatmul.f32.gmra.mxu0 %v1771
  %v1815 = vpop.f32.mrf.mxu0
  %v1816 = vadd.f32 0.0, %v1815
  %1817 = vdwg.mxu0
  %1826 = vrot.lane.b32.xlu0 %v1697, 112
  %v1827 = vpop.permute.xlu0 %1826
  %1828 = vrot.lane.b32.xlu0 %v1698, 112
  %v1829 = vpop.permute.xlu0 %1828
  %1830 = vrot.lane.b32.xlu0 %v1699, 112
  %v1831 = vpop.permute.xlu0 %1830
  %1832 = vrot.lane.b32.xlu0 %v1700, 112
  %v1833 = vpop.permute.xlu0 %1832
  %1834 = vrot.lane.b32.xlu0 %v1701, 112
  %v1835 = vpop.permute.xlu0 %1834
  %1836 = vrot.lane.b32.xlu0 %v1702, 112
  %v1837 = vpop.permute.xlu0 %1836
  %1838 = vrot.lane.b32.xlu0 %v1703, 112
  %v1839 = vpop.permute.xlu0 %1838
  %1840 = vrot.lane.b32.xlu0 %v1704, 112
  %v1841 = vpop.permute.xlu0 %1840
  %1858 = vrot.lane.b32.xlu0 %v1795, 16
  %v1859 = vpop.permute.xlu0 %1858
  %1860 = vrot.lane.b32.xlu0 %v1798, 16
  %v1861 = vpop.permute.xlu0 %1860
  %1862 = vrot.lane.b32.xlu0 %v1801, 16
  %v1863 = vpop.permute.xlu0 %1862
  %1864 = vrot.lane.b32.xlu0 %v1804, 16
  %v1865 = vpop.permute.xlu0 %1864
  %1866 = vrot.lane.b32.xlu0 %v1807, 16
  %v1867 = vpop.permute.xlu0 %1866
  %1868 = vrot.lane.b32.xlu0 %v1810, 16
  %v1869 = vpop.permute.xlu0 %1868
  %1870 = vrot.lane.b32.xlu0 %v1813, 16
  %v1871 = vpop.permute.xlu0 %1870
  %1872 = vrot.lane.b32.xlu0 %v1816, 16
  %v1873 = vpop.permute.xlu0 %1872
  %v1882 = vsel %vm495, %v1827, %v1859
  %v1883 = vsel %vm495, %v1829, %v1861
  %v1884 = vsel %vm495, %v1831, %v1863
  %v1885 = vsel %vm495, %v1833, %v1865
  %v1886 = vsel %vm495, %v1835, %v1867
  %v1887 = vsel %vm495, %v1837, %v1869
  %v1888 = vsel %vm495, %v1839, %v1871
  %v1889 = vsel %vm495, %v1841, %v1873
  %v1890 = vld [vmem:[%s12] sm:$0xff]
  %v1891 = vld [vmem:[%s12 + $0x8] sm:$0xff]
  %v1892 = vld [vmem:[%s12 + $0x10] sm:$0x1f]
  %v1893 = vld [vmem:[%s13] sm:$0x1]
  %v1895 = vperm.slane %v1893, 0
  %vm1897 = vcmask 171008
  %v1899 = vsel %vm1897, %v1882, 0
  %v1902 = vsel %vm1897, %v1883, 0
  %v1905 = vsel %vm1897, %v1884, 0
  %v1908 = vsel %vm1897, %v1885, 0
  %v1911 = vsel %vm1897, %v1886, 0
  %v1914 = vsel %vm1897, %v1887, 0
  %v1917 = vsel %vm1897, %v1888, 0
  %v1920 = vsel %vm1897, %v1889, 0
  %v1923 = vsel %vm1715, %v1892, 0
  %1925 = vmatpush.msra.mxu0 0.0
  %1926 = vmatpush.msra.mxu0 0.0
  %1927 = vmatpush.msra.mxu0 0.0
  %1928 = vmatpush.msra.mxu0 0.0
  %1929 = vmatpush.msra.mxu0 0.0
  %1930 = vmatpush.msra.mxu0 0.0
  %1931 = vmatpush.msra.mxu0 0.0
  %1932 = vmatpush.msra.mxu0 0.0
  %1933 = vmatpush.msra.mxu0 0.0
  %1934 = vmatpush.msra.mxu0 0.0
  %1935 = vmatpush.msra.mxu0 0.0
  %1936 = vmatpush.msra.mxu0 0.0
  %1937 = vmatpush.msra.mxu0 0.0
  %1938 = vmatpush.msra.mxu0 %v1923
  %1939 = vmatpush.msra.mxu0 %v1891
  %1940 = vmatpush.msra.mxu0 %v1890
  %1941 = vmatmul.f32.gmra.mxu0 %v1899
  %v1942 = vpop.f32.mrf.mxu0
  %v1943 = vadd.f32 %v1895, %v1942
  %1944 = vmatmul.f32.gmra.mxu0 %v1902
  %v1945 = vpop.f32.mrf.mxu0
  %v1946 = vadd.f32 %v1895, %v1945
  %1947 = vmatmul.f32.gmra.mxu0 %v1905
  %v1948 = vpop.f32.mrf.mxu0
  %v1949 = vadd.f32 %v1895, %v1948
  %1950 = vmatmul.f32.gmra.mxu0 %v1908
  %v1951 = vpop.f32.mrf.mxu0
  %v1952 = vadd.f32 %v1895, %v1951
  %1953 = vmatmul.f32.gmra.mxu0 %v1911
  %v1954 = vpop.f32.mrf.mxu0
  %v1955 = vadd.f32 %v1895, %v1954
  %1956 = vmatmul.f32.gmra.mxu0 %v1914
  %v1957 = vpop.f32.mrf.mxu0
  %v1958 = vadd.f32 %v1895, %v1957
  %1959 = vmatmul.f32.gmra.mxu0 %v1917
  %v1960 = vpop.f32.mrf.mxu0
  %v1961 = vadd.f32 %v1895, %v1960
  %1962 = vmatmul.f32.gmra.mxu0 %v1920
  %v1963 = vpop.f32.mrf.mxu0
  %v1964 = vadd.f32 %v1895, %v1963
  %1965 = vdwg.mxu0
  %v1966 = vxor.u32 %v1943, 2147483648
  %v1967 = vxor.u32 %v1946, 2147483648
  %v1968 = vxor.u32 %v1949, 2147483648
  %v1969 = vxor.u32 %v1952, 2147483648
  %v1970 = vxor.u32 %v1955, 2147483648
  %v1971 = vxor.u32 %v1958, 2147483648
  %v1972 = vxor.u32 %v1961, 2147483648
  %v1973 = vxor.u32 %v1964, 2147483648
  %v1974 = vmul.f32 %v1966, 1.442695
  %v1975 = vpow.pop %v1974
  %v1976 = vmul.f32 %v1967, 1.442695
  %v1977 = vpow.pop %v1976
  %v1978 = vmul.f32 %v1968, 1.442695
  %v1979 = vpow.pop %v1978
  %v1980 = vmul.f32 %v1969, 1.442695
  %v1981 = vpow.pop %v1980
  %v1982 = vmul.f32 %v1970, 1.442695
  %v1983 = vpow.pop %v1982
  %v1984 = vmul.f32 %v1971, 1.442695
  %v1985 = vpow.pop %v1984
  %v1986 = vmul.f32 %v1972, 1.442695
  %v1987 = vpow.pop %v1986
  %v1988 = vmul.f32 %v1973, 1.442695
  %v1989 = vpow.pop %v1988
  %v1990 = vadd.f32 %v1975, 1.0
  %v1991 = vadd.f32 %v1977, 1.0
  %v1992 = vadd.f32 %v1979, 1.0
  %v1993 = vadd.f32 %v1981, 1.0
  %v1994 = vadd.f32 %v1983, 1.0
  %v1995 = vadd.f32 %v1985, 1.0
  %v1996 = vadd.f32 %v1987, 1.0
  %v1997 = vadd.f32 %v1989, 1.0
  %v1998 = vrcp.pop %v1990
  %v1999 = vmul.f32 %v1990, %v1998
  %v2000 = vsub.f32 1.0, %v1999
  %v2001 = vmul.f32 %v1998, %v2000
  %v2002 = vadd.f32 %v1998, %v2001
  %vm2003 = vweird.f32 %v1990
  %vm2004 = vweird.f32 %v1998
  %vm2005 = vmor %vm2003, %vm2004
  %v2006 = vsel %vm2005, %v1998, %v2002
  %v2007 = vand.u32 2147483647, %v1990
  %vm2008 = vcmp.eq.f32.partialorder %v2007, 8.507059e+37
  %v2009 = vand.u32 %v1990, 2147483648
  %v2010 = vor.u32 1.1754944e-38, %v2009
  %v2011 = vsel %vm2008, %v2010, %v2006
  %v2012 = vmul.f32 1.0, %v2011
  %v2013 = vrcp.pop %v1991
  %v2014 = vmul.f32 %v1991, %v2013
  %v2015 = vsub.f32 1.0, %v2014
  %v2016 = vmul.f32 %v2013, %v2015
  %v2017 = vadd.f32 %v2013, %v2016
  %vm2018 = vweird.f32 %v1991
  %vm2019 = vweird.f32 %v2013
  %vm2020 = vmor %vm2018, %vm2019
  %v2021 = vsel %vm2020, %v2013, %v2017
  %v2022 = vand.u32 2147483647, %v1991
  %vm2023 = vcmp.eq.f32.partialorder %v2022, 8.507059e+37
  %v2024 = vand.u32 %v1991, 2147483648
  %v2025 = vor.u32 1.1754944e-38, %v2024
  %v2026 = vsel %vm2023, %v2025, %v2021
  %v2027 = vmul.f32 1.0, %v2026
  %v2028 = vrcp.pop %v1992
  %v2029 = vmul.f32 %v1992, %v2028
  %v2030 = vsub.f32 1.0, %v2029
  %v2031 = vmul.f32 %v2028, %v2030
  %v2032 = vadd.f32 %v2028, %v2031
  %vm2033 = vweird.f32 %v1992
  %vm2034 = vweird.f32 %v2028
  %vm2035 = vmor %vm2033, %vm2034
  %v2036 = vsel %vm2035, %v2028, %v2032
  %v2037 = vand.u32 2147483647, %v1992
  %vm2038 = vcmp.eq.f32.partialorder %v2037, 8.507059e+37
  %v2039 = vand.u32 %v1992, 2147483648
  %v2040 = vor.u32 1.1754944e-38, %v2039
  %v2041 = vsel %vm2038, %v2040, %v2036
  %v2042 = vmul.f32 1.0, %v2041
  %v2043 = vrcp.pop %v1993
  %v2044 = vmul.f32 %v1993, %v2043
  %v2045 = vsub.f32 1.0, %v2044
  %v2046 = vmul.f32 %v2043, %v2045
  %v2047 = vadd.f32 %v2043, %v2046
  %vm2048 = vweird.f32 %v1993
  %vm2049 = vweird.f32 %v2043
  %vm2050 = vmor %vm2048, %vm2049
  %v2051 = vsel %vm2050, %v2043, %v2047
  %v2052 = vand.u32 2147483647, %v1993
  %vm2053 = vcmp.eq.f32.partialorder %v2052, 8.507059e+37
  %v2054 = vand.u32 %v1993, 2147483648
  %v2055 = vor.u32 1.1754944e-38, %v2054
  %v2056 = vsel %vm2053, %v2055, %v2051
  %v2057 = vmul.f32 1.0, %v2056
  %v2058 = vrcp.pop %v1994
  %v2059 = vmul.f32 %v1994, %v2058
  %v2060 = vsub.f32 1.0, %v2059
  %v2061 = vmul.f32 %v2058, %v2060
  %v2062 = vadd.f32 %v2058, %v2061
  %vm2063 = vweird.f32 %v1994
  %vm2064 = vweird.f32 %v2058
  %vm2065 = vmor %vm2063, %vm2064
  %v2066 = vsel %vm2065, %v2058, %v2062
  %v2067 = vand.u32 2147483647, %v1994
  %vm2068 = vcmp.eq.f32.partialorder %v2067, 8.507059e+37
  %v2069 = vand.u32 %v1994, 2147483648
  %v2070 = vor.u32 1.1754944e-38, %v2069
  %v2071 = vsel %vm2068, %v2070, %v2066
  %v2072 = vmul.f32 1.0, %v2071
  %v2073 = vrcp.pop %v1995
  %v2074 = vmul.f32 %v1995, %v2073
  %v2075 = vsub.f32 1.0, %v2074
  %v2076 = vmul.f32 %v2073, %v2075
  %v2077 = vadd.f32 %v2073, %v2076
  %vm2078 = vweird.f32 %v1995
  %vm2079 = vweird.f32 %v2073
  %vm2080 = vmor %vm2078, %vm2079
  %v2081 = vsel %vm2080, %v2073, %v2077
  %v2082 = vand.u32 2147483647, %v1995
  %vm2083 = vcmp.eq.f32.partialorder %v2082, 8.507059e+37
  %v2084 = vand.u32 %v1995, 2147483648
  %v2085 = vor.u32 1.1754944e-38, %v2084
  %v2086 = vsel %vm2083, %v2085, %v2081
  %v2087 = vmul.f32 1.0, %v2086
  %v2088 = vrcp.pop %v1996
  %v2089 = vmul.f32 %v1996, %v2088
  %v2090 = vsub.f32 1.0, %v2089
  %v2091 = vmul.f32 %v2088, %v2090
  %v2092 = vadd.f32 %v2088, %v2091
  %vm2093 = vweird.f32 %v1996
  %vm2094 = vweird.f32 %v2088
  %vm2095 = vmor %vm2093, %vm2094
  %v2096 = vsel %vm2095, %v2088, %v2092
  %v2097 = vand.u32 2147483647, %v1996
  %vm2098 = vcmp.eq.f32.partialorder %v2097, 8.507059e+37
  %v2099 = vand.u32 %v1996, 2147483648
  %v2100 = vor.u32 1.1754944e-38, %v2099
  %v2101 = vsel %vm2098, %v2100, %v2096
  %v2102 = vmul.f32 1.0, %v2101
  %v2103 = vrcp.pop %v1997
  %v2104 = vmul.f32 %v1997, %v2103
  %v2105 = vsub.f32 1.0, %v2104
  %v2106 = vmul.f32 %v2103, %v2105
  %v2107 = vadd.f32 %v2103, %v2106
  %vm2108 = vweird.f32 %v1997
  %vm2109 = vweird.f32 %v2103
  %vm2110 = vmor %vm2108, %vm2109
  %v2111 = vsel %vm2110, %v2103, %v2107
  %v2112 = vand.u32 2147483647, %v1997
  %vm2113 = vcmp.eq.f32.partialorder %v2112, 8.507059e+37
  %v2114 = vand.u32 %v1997, 2147483648
  %v2115 = vor.u32 1.1754944e-38, %v2114
  %v2116 = vsel %vm2113, %v2115, %v2111
  %v2117 = vmul.f32 1.0, %v2116
  %v2118 = vld [vmem:[%s3] sm:$0x3]
  %2120 = vset.pattern.permute.xlu0 32
  %2121 = vperm.xlu0 %2120, %v2012
  %v2122 = vpop.permute.xlu0 %2121
  %2125 = vset.pattern.permute.xlu0 32
  %2126 = vperm.xlu0 %2125, %v2027
  %v2127 = vpop.permute.xlu0 %2126
  %2130 = vset.pattern.permute.xlu0 32
  %2131 = vperm.xlu0 %2130, %v2042
  %v2132 = vpop.permute.xlu0 %2131
  %2135 = vset.pattern.permute.xlu0 32
  %2136 = vperm.xlu0 %2135, %v2057
  %v2137 = vpop.permute.xlu0 %2136
  %2140 = vset.pattern.permute.xlu0 32
  %2141 = vperm.xlu0 %2140, %v2072
  %v2142 = vpop.permute.xlu0 %2141
  %2145 = vset.pattern.permute.xlu0 32
  %2146 = vperm.xlu0 %2145, %v2087
  %v2147 = vpop.permute.xlu0 %2146
  %2150 = vset.pattern.permute.xlu0 32
  %2151 = vperm.xlu0 %2150, %v2102
  %v2152 = vpop.permute.xlu0 %2151
  %2155 = vset.pattern.permute.xlu0 32
  %2156 = vperm.xlu0 %2155, %v2117
  %v2157 = vpop.permute.xlu0 %2156
  %v2159 = vmul.f32 %v1943, %v2122
  %v2160 = vmul.f32 %v1946, %v2127
  %v2161 = vmul.f32 %v1949, %v2132
  %v2162 = vmul.f32 %v1952, %v2137
  %v2163 = vmul.f32 %v1955, %v2142
  %v2164 = vmul.f32 %v1958, %v2147
  %v2165 = vmul.f32 %v1961, %v2152
  %v2166 = vmul.f32 %v1964, %v2157
  %v2168 = vsel %vm165, %v2118, 0
  %2170 = vmatpush.msra.mxu0 0.0
  %2171 = vmatpush.msra.mxu0 0.0
  %2172 = vmatpush.msra.mxu0 0.0
  %2173 = vmatpush.msra.mxu0 0.0
  %2174 = vmatpush.msra.mxu0 0.0
  %2175 = vmatpush.msra.mxu0 0.0
  %2176 = vmatpush.msra.mxu0 0.0
  %2177 = vmatpush.msra.mxu0 0.0
  %2178 = vmatpush.msra.mxu0 %v2166
  %2179 = vmatpush.msra.mxu0 %v2165
  %2180 = vmatpush.msra.mxu0 %v2164
  %2181 = vmatpush.msra.mxu0 %v2163
  %2182 = vmatpush.msra.mxu0 %v2162
  %2183 = vmatpush.msra.mxu0 %v2161
  %2184 = vmatpush.msra.mxu0 %v2160
  %2185 = vmatpush.msra.mxu0 %v2159
  %2186 = vmatmul.f32.gmra.mxu0 %v2168
  %v2187 = vpop.f32.mrf.mxu0
  %v2188 = vadd.f32 0.0, %v2187
  %2189 = vdwg.mxu0
  %v2190 = vld [vmem:[%s14] sm:$0xff]
  %v2191 = vld [vmem:[%s14 + $0x8] sm:$0xff]
  %v2192 = vld [vmem:[%s14 + $0x10] sm:$0xff]
  %v2193 = vld [vmem:[%s14 + $0x18] sm:$0xff]
  %v2194 = vld [vmem:[%s15] sm:$0x1]
  %v2196 = vperm.slane %v2194, 0
  %v2199 = vsel %vm504, %v2188, 0
  %2201 = vmatpush.msra.mxu0 0.0
  %2202 = vmatpush.msra.mxu0 0.0
  %2203 = vmatpush.msra.mxu0 0.0
  %2204 = vmatpush.msra.mxu0 0.0
  %2205 = vmatpush.msra.mxu0 0.0
  %2206 = vmatpush.msra.mxu0 0.0
  %2207 = vmatpush.msra.mxu0 0.0
  %2208 = vmatpush.msra.mxu0 0.0
  %2209 = vmatpush.msra.mxu0 0.0
  %2210 = vmatpush.msra.mxu0 0.0
  %2211 = vmatpush.msra.mxu0 0.0
  %2212 = vmatpush.msra.mxu0 0.0
  %2213 = vmatpush.msra.mxu0 %v2193
  %2214 = vmatpush.msra.mxu0 %v2192
  %2215 = vmatpush.msra.mxu0 %v2191
  %2216 = vmatpush.msra.mxu0 %v2190
  %2217 = vmatmul.f32.gmra.mxu0 %v2199
  %v2218 = vpop.f32.mrf.mxu0
  %v2219 = vadd.f32 %v2196, %v2218
  %2220 = vdwg.mxu0
  %v2221 = vmax.f32 %v2219, 0.0
  %v2222 = vld [vmem:[%s16] sm:$0xff]
  %v2223 = vld [vmem:[%s16 + $0x8] sm:$0xff]
  %v2224 = vld [vmem:[#allocation2] sm:$0x1]
  %v2226 = vperm.slane %v2224, 0
  %v2229 = vsel %vm495, %v2221, 0
  %2231 = vmatpush.msra.mxu0 0.0
  %2232 = vmatpush.msra.mxu0 0.0
  %2233 = vmatpush.msra.mxu0 0.0
  %2234 = vmatpush.msra.mxu0 0.0
  %2235 = vmatpush.msra.mxu0 0.0
  %2236 = vmatpush.msra.mxu0 0.0
  %2237 = vmatpush.msra.mxu0 0.0
  %2238 = vmatpush.msra.mxu0 0.0
  %2239 = vmatpush.msra.mxu0 0.0
  %2240 = vmatpush.msra.mxu0 0.0
  %2241 = vmatpush.msra.mxu0 0.0
  %2242 = vmatpush.msra.mxu0 0.0
  %2243 = vmatpush.msra.mxu0 0.0
  %2244 = vmatpush.msra.mxu0 0.0
  %2245 = vmatpush.msra.mxu0 %v2223
  %2246 = vmatpush.msra.mxu0 %v2222
  %2247 = vmatmul.f32.gmra.mxu0 %v2229
  %v2248 = vpop.f32.mrf.mxu0
  %v2249 = vadd.f32 %v2226, %v2248
  %2250 = vdwg.mxu0
  %vm2251 = vcmask 1024
  %2252 = vst.msk [vmem:[%s18] sm:$0x3] %vm2251, %v2249
  // Predicated region
  $region74: #{tpu_custom_call.1} parent=0 // pred_check
    _
  $region75: #{tpu_custom_call.1} parent=0 // pred_check_branch
    %2254 = sbr.rel (0) target = $region77
  $region76: #{tpu_custom_call.1} parent=0 // pred_region
    _
  $region77: #{tpu_custom_call.1} parent=0 // pred_fallthru
    _
  // Predicated region
  $region78: #{tpu_custom_call.1} parent=0 // pred_check
    _
  $region79: #{tpu_custom_call.1} parent=0 // pred_check_branch
    %2256 = sbr.rel (0) target = $region81
  $region80: #{tpu_custom_call.1} parent=0 // pred_region
    _
  $region81: #{tpu_custom_call.1} parent=0 // pred_fallthru
    _

</llo_original>
